<compile_context>
chip_gen: v6e
topology: v6e:2x2x1
jax: 0.10.0
libtpu: 0.0.40
codegen_flags: <defaults>
</compile_context>

<pallas_src>
import functools

import jax
import jax.numpy as jnp
from jax import lax
from jax.experimental import pallas as pl
from jax.experimental.pallas import tpu as pltpu

EPS = 1e-5
LANE = 128


def _round_up(x, m):
    return (x + m - 1) // m * m


def _tiles_m(m, pref=512):
    tm = min(pref, _round_up(m, 16))
    return tm, _round_up(m, tm)


def _pick_tn(np_):
    for t in (512, 256, 128):
        if np_ % t == 0:
            return t
    return LANE


# ----------------------------- Pallas kernels -----------------------------

def _matmul_stats_kernel(a_ref, b_ref, o_ref, sum_ref, sq_ref):
    # Full-K bf16 matmul on the MXU, f32 accumulation, bf16 store, and a fused
    # BatchNorm-statistics epilogue (per-tile partial sum / sum-of-squares).
    acc = jnp.dot(a_ref[...], b_ref[...], preferred_element_type=jnp.float32)
    o_ref[...] = acc.astype(o_ref.dtype)
    s = jnp.sum(acc, axis=0, keepdims=True)          # (1, tn)
    q = jnp.sum(acc * acc, axis=0, keepdims=True)    # (1, tn)
    # Stats blocks are (1, 8, tn) to keep the (8,128) layout rule; all 8
    # sublanes carry the same value, the wrapper reads row 0.
    sum_ref[...] = jnp.broadcast_to(s[None], sum_ref.shape)
    sq_ref[...] = jnp.broadcast_to(q[None], sq_ref.shape)


def _affine_kernel(x_ref, s_ref, b_ref, o_ref, *, relu):
    # y = x * scale + bias (folded BatchNorm), optional fused ReLU.
    y = x_ref[...].astype(jnp.float32) * s_ref[...] + b_ref[...]
    if relu:
        y = jnp.maximum(y, 0.0)
    o_ref[...] = y.astype(o_ref.dtype)


def _join_kernel(x_ref, skip_ref, sm_ref, bm_ref, ss_ref, bs_ref, o_ref):
    # relu( BN(main) + BN(skip) ) — skip's scale/bias are (1, 0) for identity.
    main = x_ref[...].astype(jnp.float32) * sm_ref[...] + bm_ref[...]
    skip = skip_ref[...].astype(jnp.float32) * ss_ref[...] + bs_ref[...]
    o_ref[...] = jnp.maximum(main + skip, 0.0).astype(o_ref.dtype)


# ----------------------------- Pallas wrappers -----------------------------

def pallas_matmul_stats(a_p, b_p, tm, tn):
    """(Mp,Kp)bf16 @ (Kp,Np)bf16 with fused per-tile BN-stat partials.

    Returns (y[Mp,Np] bf16, psum[gm,8,Np] f32, psq[gm,8,Np] f32)."""
    mp, kp = a_p.shape
    _, np_ = b_p.shape
    gm, gn = mp // tm, np_ // tn
    cost = pl.CostEstimate(
        flops=2 * mp * np_ * kp, transcendentals=0,
        bytes_accessed=(a_p.size * 2 + b_p.size * 2 * gm + mp * np_ * 2))
    return pl.pallas_call(
        _matmul_stats_kernel,
        out_shape=(jax.ShapeDtypeStruct((mp, np_), jnp.bfloat16),
                   jax.ShapeDtypeStruct((gm, 8, np_), jnp.float32),
                   jax.ShapeDtypeStruct((gm, 8, np_), jnp.float32)),
        grid_spec=pltpu.PrefetchScalarGridSpec(
            num_scalar_prefetch=0, grid=(gm, gn),
            in_specs=[pl.BlockSpec((tm, kp), lambda i, j: (i, 0)),
                      pl.BlockSpec((kp, tn), lambda i, j: (0, j))],
            out_specs=[pl.BlockSpec((tm, tn), lambda i, j: (i, j)),
                       pl.BlockSpec((1, 8, tn), lambda i, j: (i, 0, j)),
                       pl.BlockSpec((1, 8, tn), lambda i, j: (i, 0, j))]),
        compiler_params=pltpu.CompilerParams(
            dimension_semantics=("parallel", "parallel"),
            vmem_limit_bytes=48 * 1024 * 1024),
        cost_estimate=cost,
    )(a_p, b_p)


def pallas_affine(x_p, scale, bias, tm, cp, *, col_block=0, relu=True,
                  out_dtype=jnp.bfloat16):
    """Folded-BN affine (+ReLU) on the `col_block`-th cp-wide column block."""
    mp = x_p.shape[0]
    return pl.pallas_call(
        functools.partial(_affine_kernel, relu=relu),
        out_shape=jax.ShapeDtypeStruct((mp, cp), out_dtype),
        grid_spec=pltpu.PrefetchScalarGridSpec(
            num_scalar_prefetch=0, grid=(mp // tm,),
            in_specs=[pl.BlockSpec((tm, cp), lambda i: (i, col_block)),
                      pl.BlockSpec((1, cp), lambda i: (0, 0)),
                      pl.BlockSpec((1, cp), lambda i: (0, 0))],
            out_specs=pl.BlockSpec((tm, cp), lambda i: (i, 0))),
        compiler_params=pltpu.CompilerParams(
            dimension_semantics=("parallel",)),
    )(x_p, scale, bias)


def pallas_bn_add_relu(x_p, skip_p, sm, bm, ss, bs, tm, cp, *, skip_col):
    """relu( BN(main) + BN-or-identity(skip) ); skip read from column block."""
    mp = x_p.shape[0]
    return pl.pallas_call(
        _join_kernel,
        out_shape=jax.ShapeDtypeStruct((mp, cp), jnp.float32),
        grid_spec=pltpu.PrefetchScalarGridSpec(
            num_scalar_prefetch=0, grid=(mp // tm,),
            in_specs=[pl.BlockSpec((tm, cp), lambda i: (i, 0)),
                      pl.BlockSpec((tm, cp), lambda i: (i, skip_col)),
                      pl.BlockSpec((1, cp), lambda i: (0, 0)),
                      pl.BlockSpec((1, cp), lambda i: (0, 0)),
                      pl.BlockSpec((1, cp), lambda i: (0, 0)),
                      pl.BlockSpec((1, cp), lambda i: (0, 0))],
            out_specs=pl.BlockSpec((tm, cp), lambda i: (i, 0))),
        compiler_params=pltpu.CompilerParams(
            dimension_semantics=("parallel",)),
    )(x_p, skip_p, sm, bm, ss, bs)


# ------------------------------ JAX glue ----------------------------------

def _im2col(x_nhwc, k, stride, pad):
    n, h, w, _ = x_nhwc.shape
    if pad:
        x_nhwc = jnp.pad(x_nhwc, ((0, 0), (pad, pad), (pad, pad), (0, 0)))
    ho = (h + 2 * pad - k) // stride + 1
    wo = (w + 2 * pad - k) // stride + 1
    taps = []
    for kh in range(k):
        for kw in range(k):
            taps.append(x_nhwc[:, kh:kh + stride * (ho - 1) + 1:stride,
                                  kw:kw + stride * (wo - 1) + 1:stride, :])
    patches = jnp.stack(taps, axis=3)                 # (n, ho, wo, k*k, c)
    c = patches.shape[-1]
    return patches.reshape(n * ho * wo, k * k * c)


def _im2col_padded(x_nhwc, k, stride, pad, mp, kp):
    cols = _im2col(x_nhwc.astype(jnp.bfloat16), k, stride, pad)
    m, kk = cols.shape
    return jnp.pad(cols, ((0, mp - m), (0, kp - kk)))


def _w_to_mat(w_oihw):
    cout, cin, kh, kw = w_oihw.shape
    return jnp.transpose(w_oihw, (2, 3, 1, 0)).reshape(kh * kw * cin, cout)


def bn_scale_bias(psum, psq, gamma, beta, count, cp, col0=0):
    """Fold training-mode BN (biased var, eps=1e-5) into per-channel scale/bias.

    `psum`/`psq` are the per-tile partials from the matmul epilogue; padded
    im2col rows are exactly zero so they contribute nothing while we divide by
    the true row count."""
    c = gamma.shape[-1]
    s = jnp.sum(psum[:, 0, col0:col0 + c], axis=0)
    q = jnp.sum(psq[:, 0, col0:col0 + c], axis=0)
    mean = s / count
    var = jnp.maximum(q / count - mean * mean, 0.0)
    scale = gamma.reshape(-1) * lax.rsqrt(var + EPS)
    bias = beta.reshape(-1) - mean * scale
    scale_p = jnp.zeros((1, cp), jnp.float32).at[0, :c].set(scale)
    bias_p = jnp.zeros((1, cp), jnp.float32).at[0, :c].set(bias)
    return scale_p, bias_p


def init_params(key, in_channels, out_channels, strides):
    """He-normal (fan_out, relu gain) conv weights; BN gamma=1 beta=0."""
    def he_normal(k, shape):
        fan_out = shape[0] * shape[2] * shape[3]
        std = (2.0 / fan_out) ** 0.5
        return std * jax.random.normal(k, shape, jnp.float32)

    k1, k2, k3 = jax.random.split(key, 3)
    params = {
        "conv1_w": he_normal(k1, (out_channels, in_channels, 3, 3)),
        "bn1_gamma": jnp.ones((1, out_channels), jnp.float32),
        "bn1_beta": jnp.zeros((1, out_channels), jnp.float32),
        "conv2_w": he_normal(k2, (out_channels, out_channels, 3, 3)),
        "bn2_gamma": jnp.ones((1, out_channels), jnp.float32),
        "bn2_beta": jnp.zeros((1, out_channels), jnp.float32),
    }
    if strides > 1 or in_channels != out_channels:
        params["skip_conv_w"] = he_normal(k3, (out_channels, in_channels, 1, 1))
        params["skip_bn_gamma"] = jnp.ones((1, out_channels), jnp.float32)
        params["skip_bn_beta"] = jnp.zeros((1, out_channels), jnp.float32)
    return params


@functools.partial(jax.jit, static_argnames=("strides",))
def residual_block(x_nchw, params, *, strides):
    n, cin, h, w = x_nchw.shape
    cout = params["conv1_w"].shape[0]
    has_proj = "skip_conv_w" in params

    x = jnp.transpose(x_nchw, (0, 2, 3, 1))            # NCHW -> NHWC
    ho = (h + 2 - 3) // strides + 1
    wo = (w + 2 - 3) // strides + 1
    m = n * ho * wo
    cp = _round_up(cout, LANE)
    tm, mp = _tiles_m(m)

    # ---- conv1 (+ fused 1x1 projection skip) with fused BN-stat epilogue ----
    k1 = 9 * cin
    kp1 = _round_up(k1, LANE)
    n1 = 2 * cp if has_proj else cp
    w_comb = jnp.zeros((kp1, n1), jnp.float32)
    w_comb = w_comb.at[:k1, :cout].set(_w_to_mat(params["conv1_w"]))
    if has_proj:
        # 1x1 stride-s pad-0 conv == center tap of a 3x3 stride-s pad-1 conv.
        ws = jnp.transpose(params["skip_conv_w"],
                           (2, 3, 1, 0)).reshape(cin, cout)
        w_comb = w_comb.at[4 * cin:5 * cin, cp:cp + cout].set(ws)
    w_comb = w_comb.astype(jnp.bfloat16)

    cols1 = _im2col_padded(x, 3, strides, 1, mp, kp1)
    y1, ps1, pq1 = pallas_matmul_stats(cols1, w_comb, tm, _pick_tn(n1))

    sc1, bi1 = bn_scale_bias(ps1, pq1, params["bn1_gamma"],
                             params["bn1_beta"], m, cp, 0)
    h1 = pallas_affine(y1, sc1, bi1, tm, cp, col_block=0, relu=True)
    h1_nhwc = h1[:m, :cout].reshape(n, ho, wo, cout)

    # ---- conv2 with fused BN-stat epilogue ----
    k2 = 9 * cout
    kp2 = _round_up(k2, LANE)
    w2 = jnp.zeros((kp2, cp), jnp.float32).at[:k2, :cout].set(
        _w_to_mat(params["conv2_w"])).astype(jnp.bfloat16)
    cols2 = _im2col_padded(h1_nhwc, 3, 1, 1, mp, kp2)
    y2, ps2, pq2 = pallas_matmul_stats(cols2, w2, tm, _pick_tn(cp))
    sc2, bi2 = bn_scale_bias(ps2, pq2, params["bn2_gamma"],
                             params["bn2_beta"], m, cp, 0)

    # ---- skip scale/bias + residual join ----
    if has_proj:
        scs, bis = bn_scale_bias(ps1, pq1, params["skip_bn_gamma"],
                                 params["skip_bn_beta"], m, cp, cp)
        skip, skip_col = y1, 1                          # right half of y1
    else:
        skip = jnp.pad(x.reshape(m, cin).astype(jnp.bfloat16),
                       ((0, mp - m), (0, cp - cin)))
        skip_col = 0
        scs = jnp.pad(jnp.ones((1, cout), jnp.float32),
                      ((0, 0), (0, cp - cout)))
        bis = jnp.zeros((1, cp), jnp.float32)

    out = pallas_bn_add_relu(y2, skip, sc2, bi2, scs, bis, tm, cp,
                             skip_col=skip_col)
    out = out[:m, :cout].reshape(n, ho, wo, cout)
    return jnp.transpose(out, (0, 3, 1, 2))            # NHWC -> NCHW


# ----------------------- pure-JAX reference (check) ------------------------

def _conv_ref(x_nhwc, w_oihw, stride, pad):
    return lax.conv_general_dilated(
        x_nhwc, jnp.transpose(w_oihw, (2, 3, 1, 0)),
        window_strides=(stride, stride), padding=[(pad, pad), (pad, pad)],
        dimension_numbers=("NHWC", "HWIO", "NHWC"))


def _bn_ref(x_nhwc, gamma, beta):
    mean = jnp.mean(x_nhwc, axis=(0, 1, 2), keepdims=True)
    var = jnp.mean(jnp.square(x_nhwc - mean), axis=(0, 1, 2), keepdims=True)
    return ((x_nhwc - mean) * lax.rsqrt(var + EPS)
            * gamma.reshape(1, 1, 1, -1) + beta.reshape(1, 1, 1, -1))


def residual_block_ref(x_nchw, params, strides):
    x = jnp.transpose(x_nchw, (0, 2, 3, 1))
    h = _conv_ref(x, params["conv1_w"], strides, 1)
    h = jnp.maximum(_bn_ref(h, params["bn1_gamma"], params["bn1_beta"]), 0.0)
    h = _conv_ref(h, params["conv2_w"], 1, 1)
    h = _bn_ref(h, params["bn2_gamma"], params["bn2_beta"])
    if "skip_conv_w" in params:
        s = _conv_ref(x, params["skip_conv_w"], strides, 0)
        s = _bn_ref(s, params["skip_bn_gamma"], params["skip_bn_beta"])
    else:
        s = x
    return jnp.transpose(jnp.maximum(h + s, 0.0), (0, 3, 1, 2))


# --------------------------------- main ------------------------------------

if __name__ == "__main__":
    key = jax.random.PRNGKey(0)
    kx1, kp1, kx2, kp2 = jax.random.split(key, 4)

    # Case 1: downsampling block (stride 2, channel expansion) -> conv+BN skip
    # fused into conv1's matmul.
    n, cin, h, w = 2, 4, 16, 16
    cout, strides = 8, 2
    x1 = jax.random.normal(kx1, (n, cin, h, w), jnp.float32)
    p1 = init_params(kp1, cin, cout, strides)
    out1 = jax.block_until_ready(residual_block(x1, p1, strides=strides))
    ref1 = residual_block_ref(x1, p1, strides)
    assert out1.shape == (n, cout, h // strides, w // strides)
    assert jnp.allclose(out1, ref1, atol=5e-2, rtol=5e-2), \
        float(jnp.max(jnp.abs(out1 - ref1)))

    # Case 2: identity-skip block (stride 1, same channels).
    n2, c2, h2, w2 = 2, 8, 16, 16
    x2 = jax.random.normal(kx2, (n2, c2, h2, w2), jnp.float32)
    p2 = init_params(kp2, c2, c2, 1)
    out2 = jax.block_until_ready(residual_block(x2, p2, strides=1))
    ref2 = residual_block_ref(x2, p2, 1)
    assert out2.shape == (n2, c2, h2, w2)
    assert jnp.allclose(out2, ref2, atol=5e-2, rtol=5e-2), \
        float(jnp.max(jnp.abs(out2 - ref2)))

    print("KERNEL_OK")
</pallas_src>

<mosaic_0001>
module attributes {stable_mosaic.version = 11 : i64} {
  func.func @_matmul_stats_kernel(%arg0: i32, %arg1: i32, %arg2: memref<128x128xbf16, #tpu.memory_space<vmem>>, %arg3: memref<128x256xbf16, #tpu.memory_space<vmem>>, %arg4: memref<128x256xbf16, #tpu.memory_space<vmem>>, %arg5: memref<1x8x256xf32, #tpu.memory_space<vmem>>, %arg6: memref<1x8x256xf32, #tpu.memory_space<vmem>>) attributes {dimension_semantics = [#tpu.dimension_semantics<parallel>, #tpu.dimension_semantics<parallel>], iteration_bounds = array<i64: 1, 1>, scalar_prefetch = 0 : i64, scratch_operands = 0 : i64, tpu.core_type = #tpu.core_type<tc>, window_params = [{transform_indices = @transform_0, window_bounds = array<i64: 128, 128>}, {transform_indices = @transform_1, window_bounds = array<i64: 128, 256>}, {transform_indices = @transform_2, window_bounds = array<i64: 128, 256>}, {transform_indices = @transform_3, window_bounds = array<i64: 1, 8, 256>}, {transform_indices = @transform_4, window_bounds = array<i64: 1, 8, 256>}]} {
    %c0 = arith.constant 0 : index
    %c0_0 = arith.constant 0 : index
    %0 = vector.load %arg2[%c0, %c0_0] : memref<128x128xbf16, #tpu.memory_space<vmem>>, vector<128x128xbf16>
    %c0_1 = arith.constant 0 : index
    %c0_2 = arith.constant 0 : index
    %1 = vector.load %arg3[%c0_1, %c0_2] : memref<128x256xbf16, #tpu.memory_space<vmem>>, vector<128x256xbf16>
    %cst = arith.constant dense<0.000000e+00> : vector<128x256xf32>
    %2 = tpu.matmul %0, %1, %cst {dimension_numbers = #tpu.dot_dimension_numbers<[1], [0], [0], [1], [0, 0, 1, 1], [], []>} : vector<128x128xbf16>, vector<128x256xbf16>, vector<128x256xf32> -> vector<128x256xf32>
    %3 = arith.truncf %2 : vector<128x256xf32> to vector<128x256xbf16>
    %c0_3 = arith.constant 0 : index
    %c0_4 = arith.constant 0 : index
    %4 = vector.load %arg4[%c0_3, %c0_4] : memref<128x256xbf16, #tpu.memory_space<vmem>>, vector<128x256xbf16>
    tpu.vector_store %arg4[%c0_3, %c0_4], %3 {strides = array<i32>} : memref<128x256xbf16, #tpu.memory_space<vmem>>, vector<128x256xbf16>,
    %cst_5 = arith.constant dense<0.000000e+00> : vector<256xf32>
    %5 = vector.multi_reduction <add>, %2, %cst_5 [0] : vector<128x256xf32> to vector<256xf32>
    %6 = vector.shape_cast %5 : vector<256xf32> to vector<1x256xf32>
    %7 = arith.mulf %2, %2 : vector<128x256xf32>
    %cst_6 = arith.constant dense<0.000000e+00> : vector<256xf32>
    %8 = vector.multi_reduction <add>, %7, %cst_6 [0] : vector<128x256xf32> to vector<256xf32>
    %9 = vector.shape_cast %8 : vector<256xf32> to vector<1x256xf32>
    %10 = vector.shape_cast %6 : vector<1x256xf32> to vector<1x1x256xf32>
    %11 = vector.shape_cast %10 : vector<1x1x256xf32> to vector<1x1x256xf32>
    %12 = vector.broadcast %11 : vector<1x1x256xf32> to vector<1x8x256xf32>
    %c0_7 = arith.constant 0 : index
    %c0_8 = arith.constant 0 : index
    %c0_9 = arith.constant 0 : index
    %13 = vector.load %arg5[%c0_7, %c0_8, %c0_9] : memref<1x8x256xf32, #tpu.memory_space<vmem>>, vector<1x8x256xf32>
    tpu.vector_store %arg5[%c0_7, %c0_8, %c0_9], %12 {strides = array<i32>} : memref<1x8x256xf32, #tpu.memory_space<vmem>>, vector<1x8x256xf32>,
    %14 = vector.shape_cast %9 : vector<1x256xf32> to vector<1x1x256xf32>
    %15 = vector.shape_cast %14 : vector<1x1x256xf32> to vector<1x1x256xf32>
    %16 = vector.broadcast %15 : vector<1x1x256xf32> to vector<1x8x256xf32>
    %c0_10 = arith.constant 0 : index
    %c0_11 = arith.constant 0 : index
    %c0_12 = arith.constant 0 : index
    %17 = vector.load %arg6[%c0_10, %c0_11, %c0_12] : memref<1x8x256xf32, #tpu.memory_space<vmem>>, vector<1x8x256xf32>
    tpu.vector_store %arg6[%c0_10, %c0_11, %c0_12], %16 {strides = array<i32>} : memref<1x8x256xf32, #tpu.memory_space<vmem>>, vector<1x8x256xf32>,
    return
  }
  func.func @transform_0(%arg0: i32, %arg1: i32) -> (i32, i32) {
    %c0_i32 = arith.constant 0 : i32
    %c0_i32_0 = arith.constant 0 : i32
    return %arg0, %c0_i32 : i32, i32
  }
  func.func @transform_1(%arg0: i32, %arg1: i32) -> (i32, i32) {
    %c0_i32 = arith.constant 0 : i32
    %c0_i32_0 = arith.constant 0 : i32
    return %c0_i32, %arg1 : i32, i32
  }
  func.func @transform_2(%arg0: i32, %arg1: i32) -> (i32, i32) {
    %c0_i32 = arith.constant 0 : i32
    return %arg0, %arg1 : i32, i32
  }
  func.func @transform_3(%arg0: i32, %arg1: i32) -> (i32, i32, i32) {
    %c0_i32 = arith.constant 0 : i32
    %c0_i32_0 = arith.constant 0 : i32
    return %arg0, %c0_i32, %arg1 : i32, i32, i32
  }
  func.func @transform_4(%arg0: i32, %arg1: i32) -> (i32, i32, i32) {
    %c0_i32 = arith.constant 0 : i32
    %c0_i32_0 = arith.constant 0 : i32
    return %arg0, %c0_i32, %arg1 : i32, i32, i32
  }
}

module attributes {stable_mosaic.version = 11 : i64} {
  func.func @_affine_kernel(%arg0: i32, %arg1: memref<128x128xbf16, #tpu.memory_space<vmem>>, %arg2: memref<1x128xf32, #tpu.memory_space<vmem>>, %arg3: memref<1x128xf32, #tpu.memory_space<vmem>>, %arg4: memref<128x128xbf16, #tpu.memory_space<vmem>>) attributes {dimension_semantics = [#tpu.dimension_semantics<parallel>], iteration_bounds = array<i64: 1>, scalar_prefetch = 0 : i64, scratch_operands = 0 : i64, tpu.core_type = #tpu.core_type<tc>, window_params = [{transform_indices = @transform_0, window_bounds = array<i64: 128, 128>}, {pipeline_mode = #tpu.pipeline_mode<synchronous>, transform_indices = @transform_1, window_bounds = array<i64: 1, 128>}, {pipeline_mode = #tpu.pipeline_mode<synchronous>, transform_indices = @transform_2, window_bounds = array<i64: 1, 128>}, {transform_indices = @transform_3, window_bounds = array<i64: 128, 128>}]} {
    %c0 = arith.constant 0 : index
    %c0_0 = arith.constant 0 : index
    %0 = vector.load %arg1[%c0, %c0_0] : memref<128x128xbf16, #tpu.memory_space<vmem>>, vector<128x128xbf16>
    %1 = arith.extf %0 : vector<128x128xbf16> to vector<128x128xf32>
    %c0_1 = arith.constant 0 : index
    %c0_2 = arith.constant 0 : index
    %2 = vector.load %arg2[%c0_1, %c0_2] : memref<1x128xf32, #tpu.memory_space<vmem>>, vector<1x128xf32>
    %3 = vector.broadcast %2 : vector<1x128xf32> to vector<128x128xf32>
    %4 = arith.mulf %1, %3 : vector<128x128xf32>
    %c0_3 = arith.constant 0 : index
    %c0_4 = arith.constant 0 : index
    %5 = vector.load %arg3[%c0_3, %c0_4] : memref<1x128xf32, #tpu.memory_space<vmem>>, vector<1x128xf32>
    %6 = vector.broadcast %5 : vector<1x128xf32> to vector<128x128xf32>
    %7 = arith.addf %4, %6 : vector<128x128xf32>
    %cst = arith.constant 0.000000e+00 : f32
    %8 = vector.broadcast %cst : f32 to vector<128x128xf32>
    %9 = arith.maximumf %7, %8 : vector<128x128xf32>
    %10 = arith.truncf %9 : vector<128x128xf32> to vector<128x128xbf16>
    %c0_5 = arith.constant 0 : index
    %c0_6 = arith.constant 0 : index
    %11 = vector.load %arg4[%c0_5, %c0_6] : memref<128x128xbf16, #tpu.memory_space<vmem>>, vector<128x128xbf16>
    tpu.vector_store %arg4[%c0_5, %c0_6], %10 {strides = array<i32>} : memref<128x128xbf16, #tpu.memory_space<vmem>>, vector<128x128xbf16>,
    return
  }
  func.func @transform_0(%arg0: i32) -> (i32, i32) {
    %c0_i32 = arith.constant 0 : i32
    %c0_i32_0 = arith.constant 0 : i32
    return %arg0, %c0_i32 : i32, i32
  }
  func.func @transform_1(%arg0: i32) -> (i32, i32) {
    %c0_i32 = arith.constant 0 : i32
    %c0_i32_0 = arith.constant 0 : i32
    %c0_i32_1 = arith.constant 0 : i32
    return %c0_i32, %c0_i32_0 : i32, i32
  }
  func.func @transform_2(%arg0: i32) -> (i32, i32) {
    %c0_i32 = arith.constant 0 : i32
    %c0_i32_0 = arith.constant 0 : i32
    %c0_i32_1 = arith.constant 0 : i32
    return %c0_i32, %c0_i32_0 : i32, i32
  }
  func.func @transform_3(%arg0: i32) -> (i32, i32) {
    %c0_i32 = arith.constant 0 : i32
    %c0_i32_0 = arith.constant 0 : i32
    return %arg0, %c0_i32 : i32, i32
  }
}

module attributes {stable_mosaic.version = 11 : i64} {
  func.func @_matmul_stats_kernel(%arg0: i32, %arg1: i32, %arg2: memref<128x128xbf16, #tpu.memory_space<vmem>>, %arg3: memref<128x128xbf16, #tpu.memory_space<vmem>>, %arg4: memref<128x128xbf16, #tpu.memory_space<vmem>>, %arg5: memref<1x8x128xf32, #tpu.memory_space<vmem>>, %arg6: memref<1x8x128xf32, #tpu.memory_space<vmem>>) attributes {dimension_semantics = [#tpu.dimension_semantics<parallel>, #tpu.dimension_semantics<parallel>], iteration_bounds = array<i64: 1, 1>, scalar_prefetch = 0 : i64, scratch_operands = 0 : i64, tpu.core_type = #tpu.core_type<tc>, window_params = [{transform_indices = @transform_0, window_bounds = array<i64: 128, 128>}, {transform_indices = @transform_1, window_bounds = array<i64: 128, 128>}, {transform_indices = @transform_2, window_bounds = array<i64: 128, 128>}, {transform_indices = @transform_3, window_bounds = array<i64: 1, 8, 128>}, {transform_indices = @transform_4, window_bounds = array<i64: 1, 8, 128>}]} {
    %c0 = arith.constant 0 : index
    %c0_0 = arith.constant 0 : index
    %0 = vector.load %arg2[%c0, %c0_0] : memref<128x128xbf16, #tpu.memory_space<vmem>>, vector<128x128xbf16>
    %c0_1 = arith.constant 0 : index
    %c0_2 = arith.constant 0 : index
    %1 = vector.load %arg3[%c0_1, %c0_2] : memref<128x128xbf16, #tpu.memory_space<vmem>>, vector<128x128xbf16>
    %cst = arith.constant dense<0.000000e+00> : vector<128x128xf32>
    %2 = tpu.matmul %0, %1, %cst {dimension_numbers = #tpu.dot_dimension_numbers<[1], [0], [0], [1], [0, 0, 1, 1], [], []>} : vector<128x128xbf16>, vector<128x128xbf16>, vector<128x128xf32> -> vector<128x128xf32>
    %3 = arith.truncf %2 : vector<128x128xf32> to vector<128x128xbf16>
    %c0_3 = arith.constant 0 : index
    %c0_4 = arith.constant 0 : index
    %4 = vector.load %arg4[%c0_3, %c0_4] : memref<128x128xbf16, #tpu.memory_space<vmem>>, vector<128x128xbf16>
    tpu.vector_store %arg4[%c0_3, %c0_4], %3 {strides = array<i32>} : memref<128x128xbf16, #tpu.memory_space<vmem>>, vector<128x128xbf16>,
    %cst_5 = arith.constant dense<0.000000e+00> : vector<128xf32>
    %5 = vector.multi_reduction <add>, %2, %cst_5 [0] : vector<128x128xf32> to vector<128xf32>
    %6 = vector.shape_cast %5 : vector<128xf32> to vector<1x128xf32>
    %7 = arith.mulf %2, %2 : vector<128x128xf32>
    %cst_6 = arith.constant dense<0.000000e+00> : vector<128xf32>
    %8 = vector.multi_reduction <add>, %7, %cst_6 [0] : vector<128x128xf32> to vector<128xf32>
    %9 = vector.shape_cast %8 : vector<128xf32> to vector<1x128xf32>
    %10 = vector.shape_cast %6 : vector<1x128xf32> to vector<1x1x128xf32>
    %11 = vector.shape_cast %10 : vector<1x1x128xf32> to vector<1x1x128xf32>
    %12 = vector.broadcast %11 : vector<1x1x128xf32> to vector<1x8x128xf32>
    %c0_7 = arith.constant 0 : index
    %c0_8 = arith.constant 0 : index
    %c0_9 = arith.constant 0 : index
    %13 = vector.load %arg5[%c0_7, %c0_8, %c0_9] : memref<1x8x128xf32, #tpu.memory_space<vmem>>, vector<1x8x128xf32>
    tpu.vector_store %arg5[%c0_7, %c0_8, %c0_9], %12 {strides = array<i32>} : memref<1x8x128xf32, #tpu.memory_space<vmem>>, vector<1x8x128xf32>,
    %14 = vector.shape_cast %9 : vector<1x128xf32> to vector<1x1x128xf32>
    %15 = vector.shape_cast %14 : vector<1x1x128xf32> to vector<1x1x128xf32>
    %16 = vector.broadcast %15 : vector<1x1x128xf32> to vector<1x8x128xf32>
    %c0_10 = arith.constant 0 : index
    %c0_11 = arith.constant 0 : index
    %c0_12 = arith.constant 0 : index
    %17 = vector.load %arg6[%c0_10, %c0_11, %c0_12] : memref<1x8x128xf32, #tpu.memory_space<vmem>>, vector<1x8x128xf32>
    tpu.vector_store %arg6[%c0_10, %c0_11, %c0_12], %16 {strides = array<i32>} : memref<1x8x128xf32, #tpu.memory_space<vmem>>, vector<1x8x128xf32>,
    return
  }
  func.func @transform_0(%arg0: i32, %arg1: i32) -> (i32, i32) {
    %c0_i32 = arith.constant 0 : i32
    %c0_i32_0 = arith.constant 0 : i32
    return %arg0, %c0_i32 : i32, i32
  }
  func.func @transform_1(%arg0: i32, %arg1: i32) -> (i32, i32) {
    %c0_i32 = arith.constant 0 : i32
    %c0_i32_0 = arith.constant 0 : i32
    return %c0_i32, %arg1 : i32, i32
  }
  func.func @transform_2(%arg0: i32, %arg1: i32) -> (i32, i32) {
    %c0_i32 = arith.constant 0 : i32
    return %arg0, %arg1 : i32, i32
  }
  func.func @transform_3(%arg0: i32, %arg1: i32) -> (i32, i32, i32) {
    %c0_i32 = arith.constant 0 : i32
    %c0_i32_0 = arith.constant 0 : i32
    return %arg0, %c0_i32, %arg1 : i32, i32, i32
  }
  func.func @transform_4(%arg0: i32, %arg1: i32) -> (i32, i32, i32) {
    %c0_i32 = arith.constant 0 : i32
    %c0_i32_0 = arith.constant 0 : i32
    return %arg0, %c0_i32, %arg1 : i32, i32, i32
  }
}

module attributes {stable_mosaic.version = 11 : i64} {
  func.func @_join_kernel(%arg0: i32, %arg1: memref<128x128xbf16, #tpu.memory_space<vmem>>, %arg2: memref<128x128xbf16, #tpu.memory_space<vmem>>, %arg3: memref<1x128xf32, #tpu.memory_space<vmem>>, %arg4: memref<1x128xf32, #tpu.memory_space<vmem>>, %arg5: memref<1x128xf32, #tpu.memory_space<vmem>>, %arg6: memref<1x128xf32, #tpu.memory_space<vmem>>, %arg7: memref<128x128xf32, #tpu.memory_space<vmem>>) attributes {dimension_semantics = [#tpu.dimension_semantics<parallel>], iteration_bounds = array<i64: 1>, scalar_prefetch = 0 : i64, scratch_operands = 0 : i64, tpu.core_type = #tpu.core_type<tc>, window_params = [{transform_indices = @transform_0, window_bounds = array<i64: 128, 128>}, {transform_indices = @transform_1, window_bounds = array<i64: 128, 128>}, {pipeline_mode = #tpu.pipeline_mode<synchronous>, transform_indices = @transform_2, window_bounds = array<i64: 1, 128>}, {pipeline_mode = #tpu.pipeline_mode<synchronous>, transform_indices = @transform_3, window_bounds = array<i64: 1, 128>}, {pipeline_mode = #tpu.pipeline_mode<synchronous>, transform_indices = @transform_4, window_bounds = array<i64: 1, 128>}, {pipeline_mode = #tpu.pipeline_mode<synchronous>, transform_indices = @transform_5, window_bounds = array<i64: 1, 128>}, {transform_indices = @transform_6, window_bounds = array<i64: 128, 128>}]} {
    %c0 = arith.constant 0 : index
    %c0_0 = arith.constant 0 : index
    %0 = vector.load %arg1[%c0, %c0_0] : memref<128x128xbf16, #tpu.memory_space<vmem>>, vector<128x128xbf16>
    %1 = arith.extf %0 : vector<128x128xbf16> to vector<128x128xf32>
    %c0_1 = arith.constant 0 : index
    %c0_2 = arith.constant 0 : index
    %2 = vector.load %arg3[%c0_1, %c0_2] : memref<1x128xf32, #tpu.memory_space<vmem>>, vector<1x128xf32>
    %3 = vector.broadcast %2 : vector<1x128xf32> to vector<128x128xf32>
    %4 = arith.mulf %1, %3 : vector<128x128xf32>
    %c0_3 = arith.constant 0 : index
    %c0_4 = arith.constant 0 : index
    %5 = vector.load %arg4[%c0_3, %c0_4] : memref<1x128xf32, #tpu.memory_space<vmem>>, vector<1x128xf32>
    %6 = vector.broadcast %5 : vector<1x128xf32> to vector<128x128xf32>
    %7 = arith.addf %4, %6 : vector<128x128xf32>
    %c0_5 = arith.constant 0 : index
    %c0_6 = arith.constant 0 : index
    %8 = vector.load %arg2[%c0_5, %c0_6] : memref<128x128xbf16, #tpu.memory_space<vmem>>, vector<128x128xbf16>
    %9 = arith.extf %8 : vector<128x128xbf16> to vector<128x128xf32>
    %c0_7 = arith.constant 0 : index
    %c0_8 = arith.constant 0 : index
    %10 = vector.load %arg5[%c0_7, %c0_8] : memref<1x128xf32, #tpu.memory_space<vmem>>, vector<1x128xf32>
    %11 = vector.broadcast %10 : vector<1x128xf32> to vector<128x128xf32>
    %12 = arith.mulf %9, %11 : vector<128x128xf32>
    %c0_9 = arith.constant 0 : index
    %c0_10 = arith.constant 0 : index
    %13 = vector.load %arg6[%c0_9, %c0_10] : memref<1x128xf32, #tpu.memory_space<vmem>>, vector<1x128xf32>
    %14 = vector.broadcast %13 : vector<1x128xf32> to vector<128x128xf32>
    %15 = arith.addf %12, %14 : vector<128x128xf32>
    %16 = arith.addf %7, %15 : vector<128x128xf32>
    %cst = arith.constant 0.000000e+00 : f32
    %17 = vector.broadcast %cst : f32 to vector<128x128xf32>
    %18 = arith.maximumf %16, %17 : vector<128x128xf32>
    %c0_11 = arith.constant 0 : index
    %c0_12 = arith.constant 0 : index
    %19 = vector.load %arg7[%c0_11, %c0_12] : memref<128x128xf32, #tpu.memory_space<vmem>>, vector<128x128xf32>
    tpu.vector_store %arg7[%c0_11, %c0_12], %18 {strides = array<i32>} : memref<128x128xf32, #tpu.memory_space<vmem>>, vector<128x128xf32>,
    return
  }
  func.func @transform_0(%arg0: i32) -> (i32, i32) {
    %c0_i32 = arith.constant 0 : i32
    %c0_i32_0 = arith.constant 0 : i32
    return %arg0, %c0_i32 : i32, i32
  }
  func.func @transform_1(%arg0: i32) -> (i32, i32) {
    %c1_i32 = arith.constant 1 : i32
    %c0_i32 = arith.constant 0 : i32
    return %arg0, %c1_i32 : i32, i32
  }
  func.func @transform_2(%arg0: i32) -> (i32, i32) {
    %c0_i32 = arith.constant 0 : i32
    %c0_i32_0 = arith.constant 0 : i32
    %c0_i32_1 = arith.constant 0 : i32
    return %c0_i32, %c0_i32_0 : i32, i32
  }
  func.func @transform_3(%arg0: i32) -> (i32, i32) {
    %c0_i32 = arith.constant 0 : i32
    %c0_i32_0 = arith.constant 0 : i32
    %c0_i32_1 = arith.constant 0 : i32
    return %c0_i32, %c0_i32_0 : i32, i32
  }
  func.func @transform_4(%arg0: i32) -> (i32, i32) {
    %c0_i32 = arith.constant 0 : i32
    %c0_i32_0 = arith.constant 0 : i32
    %c0_i32_1 = arith.constant 0 : i32
    return %c0_i32, %c0_i32_0 : i32, i32
  }
  func.func @transform_5(%arg0: i32) -> (i32, i32) {
    %c0_i32 = arith.constant 0 : i32
    %c0_i32_0 = arith.constant 0 : i32
    %c0_i32_1 = arith.constant 0 : i32
    return %c0_i32, %c0_i32_0 : i32, i32
  }
  func.func @transform_6(%arg0: i32) -> (i32, i32) {
    %c0_i32 = arith.constant 0 : i32
    %c0_i32_0 = arith.constant 0 : i32
    return %arg0, %c0_i32 : i32, i32
  }
}

</mosaic_0001>

<llo_original>
// kernel: residual_block.4
$region0: #{residual_block.4}
  #allocation0 [shape = 'u32[]', space=smem, size = 0x4, offset = 0x4, fixed_abs, tag = 'smem constant byte address 0x4 - core index']
  #allocation1 [shape = 'u32[144,128]{1,0:T(1,128)}', space=vmem, size = 0x12000, scoped, tag = 'internal scratch']
  %s0 = inlined_call_operand.vmem [shape: bf16[128,128], index: 0, kind: input, shape index: {}]
  %s1 = inlined_call_operand.vmem [shape: bf16[128,256], index: 1, kind: input, shape index: {}]
  %s2 = inlined_call_operand.vmem [shape: bf16[128,256], index: 2, kind: output, shape index: {0}]
  %s3 = inlined_call_operand.vmem [shape: f32[1,8,256], index: 3, kind: output, shape index: {1}]
  %s4 = inlined_call_operand.vmem [shape: f32[1,8,256], index: 4, kind: output, shape index: {2}]
  %5 = xla_tuple %s2, %s3, %s4
  %s6 = sld [smem:[#allocation0]]
  $region34: #{residual_block.4} parent=0
    _
  %s8 = ssub.s32 1, %s6
  %s9 = scalar_select 0, %s8, %s6
  // Predicated region
  $region2: #{residual_block.4} parent=0 // pred_check
    _
  $region3: #{residual_block.4} parent=0 // pred_check_branch
    %11 = sbr.rel (0) target = $region5
  $region4: #{residual_block.4} parent=0 // pred_region
    _
  $region5: #{residual_block.4} parent=0 // pred_fallthru
    _
  // Predicated region
  $region6: #{residual_block.4} parent=0 // pred_check
    _
  $region7: #{residual_block.4} parent=0 // pred_check_branch
    %13 = sbr.rel (0) target = $region9
  $region8: #{residual_block.4} parent=0 // pred_region
    _
  $region9: #{residual_block.4} parent=0 // pred_fallthru
    _
  %v15 = vld [vmem:[%s0] sm:$0xf]
  %v16 = vld [vmem:[%s0 + $0x4] sm:$0xf]
  %v17 = vld [vmem:[%s0 + $0x8] sm:$0xf]
  %v18 = vld [vmem:[%s0 + $0xc] sm:$0xf]
  %v19 = vld [vmem:[%s0 + $0x10] sm:$0xf]
  %v20 = vld [vmem:[%s0 + $0x14] sm:$0xf]
  %v21 = vld [vmem:[%s0 + $0x18] sm:$0xf]
  %v22 = vld [vmem:[%s0 + $0x1c] sm:$0xf]
  %v23 = vld [vmem:[%s0 + $0x20] sm:$0xf]
  %v24 = vld [vmem:[%s0 + $0x24] sm:$0xf]
  %v25 = vld [vmem:[%s0 + $0x28] sm:$0xf]
  %v26 = vld [vmem:[%s0 + $0x2c] sm:$0xf]
  %v27 = vld [vmem:[%s0 + $0x30] sm:$0xf]
  %v28 = vld [vmem:[%s0 + $0x34] sm:$0xf]
  %v29 = vld [vmem:[%s0 + $0x38] sm:$0xf]
  %v30 = vld [vmem:[%s0 + $0x3c] sm:$0xf]
  %v31 = vld [vmem:[%s1] sm:$0xff]
  %v32 = vld [vmem:[%s1 + $0x8] sm:$0xff]
  %v33 = vld [vmem:[%s1 + $0x10] sm:$0xff]
  %v34 = vld [vmem:[%s1 + $0x18] sm:$0xff]
  %v35 = vld [vmem:[%s1 + $0x20] sm:$0xff]
  %v36 = vld [vmem:[%s1 + $0x28] sm:$0xff]
  %v37 = vld [vmem:[%s1 + $0x30] sm:$0xff]
  %v38 = vld [vmem:[%s1 + $0x38] sm:$0xff]
  %v39 = vld [vmem:[%s1 + $0x40] sm:$0xff]
  %v40 = vld [vmem:[%s1 + $0x48] sm:$0xff]
  %v41 = vld [vmem:[%s1 + $0x50] sm:$0xff]
  %v42 = vld [vmem:[%s1 + $0x58] sm:$0xff]
  %v43 = vld [vmem:[%s1 + $0x60] sm:$0xff]
  %v44 = vld [vmem:[%s1 + $0x68] sm:$0xff]
  %v45 = vld [vmem:[%s1 + $0x70] sm:$0xff]
  %v46 = vld [vmem:[%s1 + $0x78] sm:$0xff]
  %v63 = vunpack.c.l.b16 %v15
  %v64 = vunpack.c.l.b16 %v16
  %v65 = vunpack.c.l.b16 %v17
  %v66 = vunpack.c.l.b16 %v18
  %v67 = vunpack.c.l.b16 %v19
  %v68 = vunpack.c.l.b16 %v20
  %v69 = vunpack.c.l.b16 %v21
  %v70 = vunpack.c.l.b16 %v22
  %v71 = vunpack.c.l.b16 %v23
  %v72 = vunpack.c.l.b16 %v24
  %v73 = vunpack.c.l.b16 %v25
  %v74 = vunpack.c.l.b16 %v26
  %v75 = vunpack.c.l.b16 %v27
  %v76 = vunpack.c.l.b16 %v28
  %v77 = vunpack.c.l.b16 %v29
  %v78 = vunpack.c.l.b16 %v30
  %v79 = vpack.c.b16 %v64, %v63
  %v80 = vpack.c.b16 %v66, %v65
  %v81 = vpack.c.b16 %v68, %v67
  %v82 = vpack.c.b16 %v70, %v69
  %v83 = vpack.c.b16 %v72, %v71
  %v84 = vpack.c.b16 %v74, %v73
  %v85 = vpack.c.b16 %v76, %v75
  %v86 = vpack.c.b16 %v78, %v77
  %v111 = vunpack.c.l.b16 %v31
  %v112 = vunpack.c.h.b16 %v31
  %v113 = vunpack.c.l.b16 %v32
  %v114 = vunpack.c.h.b16 %v32
  %v115 = vunpack.c.l.b16 %v33
  %v116 = vunpack.c.h.b16 %v33
  %v117 = vunpack.c.l.b16 %v34
  %v118 = vunpack.c.h.b16 %v34
  %v119 = vunpack.c.l.b16 %v35
  %v120 = vunpack.c.h.b16 %v35
  %v121 = vunpack.c.l.b16 %v36
  %v122 = vunpack.c.h.b16 %v36
  %v123 = vunpack.c.l.b16 %v37
  %v124 = vunpack.c.h.b16 %v37
  %v125 = vunpack.c.l.b16 %v38
  %v126 = vunpack.c.h.b16 %v38
  %v127 = vunpack.c.l.b16 %v39
  %v128 = vunpack.c.h.b16 %v39
  %v129 = vunpack.c.l.b16 %v40
  %v130 = vunpack.c.h.b16 %v40
  %v131 = vunpack.c.l.b16 %v41
  %v132 = vunpack.c.h.b16 %v41
  %v133 = vunpack.c.l.b16 %v42
  %v134 = vunpack.c.h.b16 %v42
  %v135 = vunpack.c.l.b16 %v43
  %v136 = vunpack.c.h.b16 %v43
  %v137 = vunpack.c.l.b16 %v44
  %v138 = vunpack.c.h.b16 %v44
  %v139 = vunpack.c.l.b16 %v45
  %v140 = vunpack.c.h.b16 %v45
  %v141 = vunpack.c.l.b16 %v46
  %v142 = vunpack.c.h.b16 %v46
  %v143 = vpack.c.b16 %v113, %v111
  %v144 = vpack.c.b16 %v114, %v112
  %v145 = vpack.c.b16 %v117, %v115
  %v146 = vpack.c.b16 %v118, %v116
  %v147 = vpack.c.b16 %v121, %v119
  %v148 = vpack.c.b16 %v122, %v120
  %v149 = vpack.c.b16 %v125, %v123
  %v150 = vpack.c.b16 %v126, %v124
  %v151 = vpack.c.b16 %v129, %v127
  %v152 = vpack.c.b16 %v130, %v128
  %v153 = vpack.c.b16 %v133, %v131
  %v154 = vpack.c.b16 %v134, %v132
  %v155 = vpack.c.b16 %v137, %v135
  %v156 = vpack.c.b16 %v138, %v136
  %v157 = vpack.c.b16 %v141, %v139
  %v158 = vpack.c.b16 %v142, %v140
  %175 = vmatprep.subr.bf16.mxu0 %v158
  %176 = vmatpush1.bf16.msra.mxu0 %v157
  %177 = vmatprep.subr.bf16.mxu0 %v156
  %178 = vmatpush1.bf16.msra.mxu0 %v155
  %179 = vmatprep.subr.bf16.mxu0 %v154
  %180 = vmatpush1.bf16.msra.mxu0 %v153
  %181 = vmatprep.subr.bf16.mxu0 %v152
  %182 = vmatpush1.bf16.msra.mxu0 %v151
  %183 = vmatprep.subr.bf16.mxu0 %v150
  %184 = vmatpush1.bf16.msra.mxu0 %v149
  %185 = vmatprep.subr.bf16.mxu0 %v148
  %186 = vmatpush1.bf16.msra.mxu0 %v147
  %187 = vmatprep.subr.bf16.mxu0 %v146
  %188 = vmatpush1.bf16.msra.mxu0 %v145
  %189 = vmatprep.subr.bf16.mxu0 %v144
  %190 = vmatpush1.bf16.msra.mxu0 %v143
  %191 = vmatprep.subr.bf16.mxu0 0
  %192 = vmatpush2.bf16.msra.mxu0 0
  %193 = vmatprep.subr.bf16.mxu0 0
  %194 = vmatpush2.bf16.msra.mxu0 0
  %195 = vmatprep.subr.bf16.mxu0 0
  %196 = vmatpush2.bf16.msra.mxu0 0
  %197 = vmatprep.subr.bf16.mxu0 0
  %198 = vmatpush2.bf16.msra.mxu0 0
  %199 = vmatprep.subr.bf16.mxu0 0
  %200 = vmatpush2.bf16.msra.mxu0 0
  %201 = vmatprep.subr.bf16.mxu0 0
  %202 = vmatpush2.bf16.msra.mxu0 0
  %203 = vmatprep.subr.bf16.mxu0 0
  %204 = vmatpush2.bf16.msra.mxu0 0
  %205 = vmatprep.subr.bf16.mxu0 0
  %206 = vmatpush2.bf16.msra.mxu0 0
  %207 = vmatprep.mubr.bf16.mxu0 0
  %208 = vmatmul.mubr.bf16.gmra.mxu0 %v79
  %v209 = vpop.f32.mrf.mxu0
  %v210 = vadd.f32 0.0, %v209
  %v211 = vpop.f32.mrf.mxu0
  %v212 = vadd.f32 0.0, %v211
  %v213 = vpop.f32.mrf.mxu0
  %v214 = vadd.f32 0.0, %v213
  %v215 = vpop.f32.mrf.mxu0
  %v216 = vadd.f32 0.0, %v215
  %217 = vmatprep.mubr.bf16.mxu0 0
  %218 = vmatmul.mubr.bf16.gmra.mxu0 %v80
  %v219 = vpop.f32.mrf.mxu0
  %v220 = vadd.f32 0.0, %v219
  %v221 = vpop.f32.mrf.mxu0
  %v222 = vadd.f32 0.0, %v221
  %v223 = vpop.f32.mrf.mxu0
  %v224 = vadd.f32 0.0, %v223
  %v225 = vpop.f32.mrf.mxu0
  %v226 = vadd.f32 0.0, %v225
  %227 = vmatprep.mubr.bf16.mxu0 0
  %228 = vmatmul.mubr.bf16.gmra.mxu0 %v81
  %v229 = vpop.f32.mrf.mxu0
  %v230 = vadd.f32 0.0, %v229
  %v231 = vpop.f32.mrf.mxu0
  %v232 = vadd.f32 0.0, %v231
  %v233 = vpop.f32.mrf.mxu0
  %v234 = vadd.f32 0.0, %v233
  %v235 = vpop.f32.mrf.mxu0
  %v236 = vadd.f32 0.0, %v235
  %237 = vmatprep.mubr.bf16.mxu0 0
  %238 = vmatmul.mubr.bf16.gmra.mxu0 %v82
  %v239 = vpop.f32.mrf.mxu0
  %v240 = vadd.f32 0.0, %v239
  %v241 = vpop.f32.mrf.mxu0
  %v242 = vadd.f32 0.0, %v241
  %v243 = vpop.f32.mrf.mxu0
  %v244 = vadd.f32 0.0, %v243
  %v245 = vpop.f32.mrf.mxu0
  %v246 = vadd.f32 0.0, %v245
  %247 = vmatprep.mubr.bf16.mxu0 0
  %248 = vmatmul.mubr.bf16.gmra.mxu0 %v83
  %v249 = vpop.f32.mrf.mxu0
  %v250 = vadd.f32 0.0, %v249
  %v251 = vpop.f32.mrf.mxu0
  %v252 = vadd.f32 0.0, %v251
  %v253 = vpop.f32.mrf.mxu0
  %v254 = vadd.f32 0.0, %v253
  %v255 = vpop.f32.mrf.mxu0
  %v256 = vadd.f32 0.0, %v255
  %257 = vmatprep.mubr.bf16.mxu0 0
  %258 = vmatmul.mubr.bf16.gmra.mxu0 %v84
  %v259 = vpop.f32.mrf.mxu0
  %v260 = vadd.f32 0.0, %v259
  %v261 = vpop.f32.mrf.mxu0
  %v262 = vadd.f32 0.0, %v261
  %v263 = vpop.f32.mrf.mxu0
  %v264 = vadd.f32 0.0, %v263
  %v265 = vpop.f32.mrf.mxu0
  %v266 = vadd.f32 0.0, %v265
  %267 = vmatprep.mubr.bf16.mxu0 0
  %268 = vmatmul.mubr.bf16.gmra.mxu0 %v85
  %v269 = vpop.f32.mrf.mxu0
  %v270 = vadd.f32 0.0, %v269
  %v271 = vpop.f32.mrf.mxu0
  %v272 = vadd.f32 0.0, %v271
  %v273 = vpop.f32.mrf.mxu0
  %v274 = vadd.f32 0.0, %v273
  %v275 = vpop.f32.mrf.mxu0
  %v276 = vadd.f32 0.0, %v275
  %277 = vmatprep.mubr.bf16.mxu0 0
  %278 = vmatmul.mubr.bf16.gmra.mxu0 %v86
  %v279 = vpop.f32.mrf.mxu0
  %v280 = vadd.f32 0.0, %v279
  %v281 = vpop.f32.mrf.mxu0
  %v282 = vadd.f32 0.0, %v281
  %v283 = vpop.f32.mrf.mxu0
  %v284 = vadd.f32 0.0, %v283
  %v285 = vpop.f32.mrf.mxu0
  %v286 = vadd.f32 0.0, %v285
  %287 = vdwg.mxu0
  %v288 = vpack.c.bf16 %v214, %v210
  %v289 = vpack.c.bf16 %v216, %v212
  %v290 = vpack.c.bf16 %v224, %v220
  %v291 = vpack.c.bf16 %v226, %v222
  %v292 = vpack.c.bf16 %v234, %v230
  %v293 = vpack.c.bf16 %v236, %v232
  %v294 = vpack.c.bf16 %v244, %v240
  %v295 = vpack.c.bf16 %v246, %v242
  %v296 = vpack.c.bf16 %v254, %v250
  %v297 = vpack.c.bf16 %v256, %v252
  %v298 = vpack.c.bf16 %v264, %v260
  %v299 = vpack.c.bf16 %v266, %v262
  %v300 = vpack.c.bf16 %v274, %v270
  %v301 = vpack.c.bf16 %v276, %v272
  %v302 = vpack.c.bf16 %v284, %v280
  %v303 = vpack.c.bf16 %v286, %v282
  %v320 = vunpack.c.l.b16 %v288
  %v321 = vunpack.c.l.b16 %v289
  %v322 = vunpack.c.h.b16 %v288
  %v323 = vunpack.c.h.b16 %v289
  %v324 = vunpack.c.l.b16 %v290
  %v325 = vunpack.c.l.b16 %v291
  %v326 = vunpack.c.h.b16 %v290
  %v327 = vunpack.c.h.b16 %v291
  %v328 = vunpack.c.l.b16 %v292
  %v329 = vunpack.c.l.b16 %v293
  %v330 = vunpack.c.h.b16 %v292
  %v331 = vunpack.c.h.b16 %v293
  %v332 = vunpack.c.l.b16 %v294
  %v333 = vunpack.c.l.b16 %v295
  %v334 = vunpack.c.h.b16 %v294
  %v335 = vunpack.c.h.b16 %v295
  %v336 = vunpack.c.l.b16 %v296
  %v337 = vunpack.c.l.b16 %v297
  %v338 = vunpack.c.h.b16 %v296
  %v339 = vunpack.c.h.b16 %v297
  %v340 = vunpack.c.l.b16 %v298
  %v341 = vunpack.c.l.b16 %v299
  %v342 = vunpack.c.h.b16 %v298
  %v343 = vunpack.c.h.b16 %v299
  %v344 = vunpack.c.l.b16 %v300
  %v345 = vunpack.c.l.b16 %v301
  %v346 = vunpack.c.h.b16 %v300
  %v347 = vunpack.c.h.b16 %v301
  %v348 = vunpack.c.l.b16 %v302
  %v349 = vunpack.c.l.b16 %v303
  %v350 = vunpack.c.h.b16 %v302
  %v351 = vunpack.c.h.b16 %v303
  %v352 = vpack.c.b16 %v321, %v320
  %v353 = vpack.c.b16 %v323, %v322
  %v354 = vpack.c.b16 %v325, %v324
  %v355 = vpack.c.b16 %v327, %v326
  %v356 = vpack.c.b16 %v329, %v328
  %v357 = vpack.c.b16 %v331, %v330
  %v358 = vpack.c.b16 %v333, %v332
  %v359 = vpack.c.b16 %v335, %v334
  %v360 = vpack.c.b16 %v337, %v336
  %v361 = vpack.c.b16 %v339, %v338
  %v362 = vpack.c.b16 %v341, %v340
  %v363 = vpack.c.b16 %v343, %v342
  %v364 = vpack.c.b16 %v345, %v344
  %v365 = vpack.c.b16 %v347, %v346
  %v366 = vpack.c.b16 %v349, %v348
  %v367 = vpack.c.b16 %v351, %v350
  %384 = vst [vmem:[%s2] sm:$0xff] %v352
  %385 = vst [vmem:[%s2 + $0x8] sm:$0xff] %v353
  %386 = vst [vmem:[%s2 + $0x10] sm:$0xff] %v354
  %387 = vst [vmem:[%s2 + $0x18] sm:$0xff] %v355
  %388 = vst [vmem:[%s2 + $0x20] sm:$0xff] %v356
  %389 = vst [vmem:[%s2 + $0x28] sm:$0xff] %v357
  %390 = vst [vmem:[%s2 + $0x30] sm:$0xff] %v358
  %391 = vst [vmem:[%s2 + $0x38] sm:$0xff] %v359
  %392 = vst [vmem:[%s2 + $0x40] sm:$0xff] %v360
  %393 = vst [vmem:[%s2 + $0x48] sm:$0xff] %v361
  %394 = vst [vmem:[%s2 + $0x50] sm:$0xff] %v362
  %395 = vst [vmem:[%s2 + $0x58] sm:$0xff] %v363
  %396 = vst [vmem:[%s2 + $0x60] sm:$0xff] %v364
  %397 = vst [vmem:[%s2 + $0x68] sm:$0xff] %v365
  %398 = vst [vmem:[%s2 + $0x70] sm:$0xff] %v366
  %399 = vst [vmem:[%s2 + $0x78] sm:$0xff] %v367
  %v400 = vadd.f32 %v210, %v214
  %v401 = vadd.f32 %v400, %v220
  %v402 = vadd.f32 %v401, %v224
  %v403 = vadd.f32 %v402, %v230
  %v404 = vadd.f32 %v403, %v234
  %v405 = vadd.f32 %v404, %v240
  %v406 = vadd.f32 %v405, %v244
  %v407 = vadd.f32 %v406, %v250
  %v408 = vadd.f32 %v407, %v254
  %v409 = vadd.f32 %v408, %v260
  %v410 = vadd.f32 %v409, %v264
  %v411 = vadd.f32 %v410, %v270
  %v412 = vadd.f32 %v411, %v274
  %v413 = vadd.f32 %v412, %v280
  %v414 = vadd.f32 %v413, %v284
  %v415 = vrot.slane %v414, 4
  %v416 = vadd.f32 %v414, %v415
  %v417 = vrot.slane %v416, 2
  %v418 = vadd.f32 %v416, %v417
  %v419 = vrot.slane %v418, 1
  %v420 = vadd.f32 %v418, %v419
  %v421 = vadd.f32 %v212, %v216
  %v422 = vadd.f32 %v421, %v222
  %v423 = vadd.f32 %v422, %v226
  %v424 = vadd.f32 %v423, %v232
  %v425 = vadd.f32 %v424, %v236
  %v426 = vadd.f32 %v425, %v242
  %v427 = vadd.f32 %v426, %v246
  %v428 = vadd.f32 %v427, %v252
  %v429 = vadd.f32 %v428, %v256
  %v430 = vadd.f32 %v429, %v262
  %v431 = vadd.f32 %v430, %v266
  %v432 = vadd.f32 %v431, %v272
  %v433 = vadd.f32 %v432, %v276
  %v434 = vadd.f32 %v433, %v282
  %v435 = vadd.f32 %v434, %v286
  %v436 = vrot.slane %v435, 4
  %v437 = vadd.f32 %v435, %v436
  %v438 = vrot.slane %v437, 2
  %v439 = vadd.f32 %v437, %v438
  %v440 = vrot.slane %v439, 1
  %v441 = vadd.f32 %v439, %v440
  %v442 = vmul.f32 %v210, %v210
  %v443 = vmul.f32 %v212, %v212
  %v444 = vmul.f32 %v214, %v214
  %v445 = vmul.f32 %v216, %v216
  %v446 = vmul.f32 %v220, %v220
  %v447 = vmul.f32 %v222, %v222
  %v448 = vmul.f32 %v224, %v224
  %v449 = vmul.f32 %v226, %v226
  %v450 = vmul.f32 %v230, %v230
  %v451 = vmul.f32 %v232, %v232
  %v452 = vmul.f32 %v234, %v234
  %v453 = vmul.f32 %v236, %v236
  %v454 = vmul.f32 %v240, %v240
  %v455 = vmul.f32 %v242, %v242
  %v456 = vmul.f32 %v244, %v244
  %v457 = vmul.f32 %v246, %v246
  %v458 = vmul.f32 %v250, %v250
  %v459 = vmul.f32 %v252, %v252
  %v460 = vmul.f32 %v254, %v254
  %v461 = vmul.f32 %v256, %v256
  %v462 = vmul.f32 %v260, %v260
  %v463 = vmul.f32 %v262, %v262
  %v464 = vmul.f32 %v264, %v264
  %v465 = vmul.f32 %v266, %v266
  %v466 = vmul.f32 %v270, %v270
  %v467 = vmul.f32 %v272, %v272
  %v468 = vmul.f32 %v274, %v274
  %v469 = vmul.f32 %v276, %v276
  %v470 = vmul.f32 %v280, %v280
  %v471 = vmul.f32 %v282, %v282
  %v472 = vmul.f32 %v284, %v284
  %v473 = vmul.f32 %v286, %v286
  %v474 = vadd.f32 %v442, %v444
  %v475 = vadd.f32 %v474, %v446
  %v476 = vadd.f32 %v475, %v448
  %v477 = vadd.f32 %v476, %v450
  %v478 = vadd.f32 %v477, %v452
  %v479 = vadd.f32 %v478, %v454
  %v480 = vadd.f32 %v479, %v456
  %v481 = vadd.f32 %v480, %v458
  %v482 = vadd.f32 %v481, %v460
  %v483 = vadd.f32 %v482, %v462
  %v484 = vadd.f32 %v483, %v464
  %v485 = vadd.f32 %v484, %v466
  %v486 = vadd.f32 %v485, %v468
  %v487 = vadd.f32 %v486, %v470
  %v488 = vadd.f32 %v487, %v472
  %v489 = vrot.slane %v488, 4
  %v490 = vadd.f32 %v488, %v489
  %v491 = vrot.slane %v490, 2
  %v492 = vadd.f32 %v490, %v491
  %v493 = vrot.slane %v492, 1
  %v494 = vadd.f32 %v492, %v493
  %v495 = vadd.f32 %v443, %v445
  %v496 = vadd.f32 %v495, %v447
  %v497 = vadd.f32 %v496, %v449
  %v498 = vadd.f32 %v497, %v451
  %v499 = vadd.f32 %v498, %v453
  %v500 = vadd.f32 %v499, %v455
  %v501 = vadd.f32 %v500, %v457
  %v502 = vadd.f32 %v501, %v459
  %v503 = vadd.f32 %v502, %v461
  %v504 = vadd.f32 %v503, %v463
  %v505 = vadd.f32 %v504, %v465
  %v506 = vadd.f32 %v505, %v467
  %v507 = vadd.f32 %v506, %v469
  %v508 = vadd.f32 %v507, %v471
  %v509 = vadd.f32 %v508, %v473
  %v510 = vrot.slane %v509, 4
  %v511 = vadd.f32 %v509, %v510
  %v512 = vrot.slane %v511, 2
  %v513 = vadd.f32 %v511, %v512
  %v514 = vrot.slane %v513, 1
  %v515 = vadd.f32 %v513, %v514
  %516 = vst [vmem:[%s3] sm:$0xff] %v420
  %517 = vst [vmem:[%s3 + $0x8] sm:$0xff] %v441
  %518 = vst [vmem:[%s4] sm:$0xff] %v494
  %519 = vst [vmem:[%s4 + $0x8] sm:$0xff] %v515
  // Predicated region
  $region10: #{residual_block.4} parent=0 // pred_check
    _
  $region11: #{residual_block.4} parent=0 // pred_check_branch
    %521 = sbr.rel (0) target = $region13
  $region12: #{residual_block.4} parent=0 // pred_region
    _
  $region13: #{residual_block.4} parent=0 // pred_fallthru
    _
  // Predicated region
  $region14: #{residual_block.4} parent=0 // pred_check
    _
  $region15: #{residual_block.4} parent=0 // pred_check_branch
    %523 = sbr.rel (0) target = $region17
  $region16: #{residual_block.4} parent=0 // pred_region
    _
  $region17: #{residual_block.4} parent=0 // pred_fallthru
    _
  // Predicated region
  $region18: #{residual_block.4} parent=0 // pred_check
    _
  $region19: #{residual_block.4} parent=0 // pred_check_branch
    %525 = sbr.rel (0) target = $region21
  $region20: #{residual_block.4} parent=0 // pred_region
    _
  $region21: #{residual_block.4} parent=0 // pred_fallthru
    _
  // Predicated region
  $region22: #{residual_block.4} parent=0 // pred_check
    _
  $region23: #{residual_block.4} parent=0 // pred_check_branch
    %527 = sbr.rel (0) target = $region25
  $region24: #{residual_block.4} parent=0 // pred_region
    _
  $region25: #{residual_block.4} parent=0 // pred_fallthru
    _
  // Predicated region
  $region26: #{residual_block.4} parent=0 // pred_check
    _
  $region27: #{residual_block.4} parent=0 // pred_check_branch
    %529 = sbr.rel (0) target = $region29
  $region28: #{residual_block.4} parent=0 // pred_region
    _
  $region29: #{residual_block.4} parent=0 // pred_fallthru
    _
  // Predicated region
  $region30: #{residual_block.4} parent=0 // pred_check
    _
  $region31: #{residual_block.4} parent=0 // pred_check_branch
    %531 = sbr.rel (0) target = $region33
  $region32: #{residual_block.4} parent=0 // pred_region
    _
  $region33: #{residual_block.4} parent=0 // pred_fallthru
    _

// kernel: residual_block.5
$region0: #{residual_block.5}
  #allocation0 [shape = 'u32[]', space=smem, size = 0x4, offset = 0x4, fixed_abs, tag = 'smem constant byte address 0x4 - core index']
  #allocation1 [shape = 'u32[144,128]{1,0:T(1,128)}', space=vmem, size = 0x12000, scoped, tag = 'internal scratch']
  %s0 = inlined_call_operand.vmem [shape: bf16[128,256], index: 0, kind: input, shape index: {}]
  %s1 = inlined_call_operand.vmem [shape: f32[1,128], index: 1, kind: input, shape index: {}]
  %s2 = inlined_call_operand.vmem [shape: f32[1,128], index: 2, kind: input, shape index: {}]
  %s3 = inlined_call_operand.vmem [shape: bf16[128,128], index: 3, kind: output, shape index: {}]
  %s4 = sld [smem:[#allocation0]]
  $region63: #{residual_block.5} parent=0
    _
  %s6 = ssub.s32 1, %s4
  %s7 = scalar_select 0, %s6, %s4
  $region1: #{residual_block.5} parent=0
    #allocation2 [shape = 'u8[32768]{0}', space=vmem, size = 0x8000, scoped, tag = 'input window, operand 0, single buffered']
    // Predicated region
    $region2: #{residual_block.5} parent=1 // pred_check
      _
    $region3: #{residual_block.5} parent=1 // pred_check_branch
      %9 = sbr.rel (0) target = $region5
    $region4: #{residual_block.5} parent=1 // pred_region
      // Predicated region
      $region6: #{residual_block.5} parent=4 // pred_check
        _
      $region7: #{residual_block.5} parent=4 // pred_check_branch
        %11 = sbr.rel (0) target = $region9
      $region8: #{residual_block.5} parent=4 // pred_region
        // Predicated region
        $region10: #{residual_block.5} parent=8 // pred_check
          _
        $region11: #{residual_block.5} parent=8 // pred_check_branch
          %13 = sbr.rel target = $region13
        $region12: #{residual_block.5} parent=8 // pred_region
          // Predicated region
          $region25: #{residual_block.5} parent=12 // pred_check
            _
          $region26: #{residual_block.5} parent=12 // pred_check_branch
            %59 = sbr.rel (0) target = $region28
          $region27: #{residual_block.5} parent=12 // pred_region
            loop: start=0, step=1, limit=1
            $region29: #{residual_block.5} parent=27 // loop_pre_header
              _
            $region30: #{residual_block.5} parent=27 // loop_header
              %s61 = sphi 0, %s65
              %p62 = scmp.ge.s32.totalorder %s61, 1
              %s66 = sphi %s0, %s0
              %s67 = sphi [#allocation2], [#allocation2]
            $region31: #{residual_block.5} parent=27 // loop_header_branch
              %64 = sbr.rel (%p62) target = $region35
            $region32: #{residual_block.5} parent=27 // loop_body
              _
            $region33: #{residual_block.5} parent=27 // loop_footer
              %s65 = sadd.s32 1, %s61
            $region34: #{residual_block.5} parent=27 // loop_footer_branch
              %60 = sbr.rel target = $region30
            $region35: #{residual_block.5} parent=27 // loop_exit
              _
            %s69 = ssub.s32 16, 1
            loop: start=0, step=1, limit=1
            $region36: #{residual_block.5} parent=27 // loop_pre_header
              _
            $region37: #{residual_block.5} parent=27 // loop_header
              %s71 = sphi 0, %s75
              %p72 = scmp.ge.s32.totalorder %s71, 1
              %s76 = sphi %s0, %s0
              %s77 = sphi [#allocation2], [#allocation2]
            $region38: #{residual_block.5} parent=27 // loop_header_branch
              %74 = sbr.rel (%p72) target = $region42
            $region39: #{residual_block.5} parent=27 // loop_body
              %v78 = vld [vmem:[%s76] sm:%s69]
              %79 = vst [vmem:[%s77] sm:%s69] %v78
              %v80 = vld [vmem:[%s76 + $0x8] sm:%s69]
              %81 = vst [vmem:[%s77 + $0x4] sm:%s69] %v80
              %v82 = vld [vmem:[%s76 + $0x10] sm:%s69]
              %83 = vst [vmem:[%s77 + $0x8] sm:%s69] %v82
              %v84 = vld [vmem:[%s76 + $0x18] sm:%s69]
              %85 = vst [vmem:[%s77 + $0xc] sm:%s69] %v84
              %v86 = vld [vmem:[%s76 + $0x20] sm:%s69]
              %87 = vst [vmem:[%s77 + $0x10] sm:%s69] %v86
              %v88 = vld [vmem:[%s76 + $0x28] sm:%s69]
              %89 = vst [vmem:[%s77 + $0x14] sm:%s69] %v88
              %v90 = vld [vmem:[%s76 + $0x30] sm:%s69]
              %91 = vst [vmem:[%s77 + $0x18] sm:%s69] %v90
              %v92 = vld [vmem:[%s76 + $0x38] sm:%s69]
              %93 = vst [vmem:[%s77 + $0x1c] sm:%s69] %v92
              %v94 = vld [vmem:[%s76 + $0x40] sm:%s69]
              %95 = vst [vmem:[%s77 + $0x20] sm:%s69] %v94
              %v96 = vld [vmem:[%s76 + $0x48] sm:%s69]
              %97 = vst [vmem:[%s77 + $0x24] sm:%s69] %v96
              %v98 = vld [vmem:[%s76 + $0x50] sm:%s69]
              %99 = vst [vmem:[%s77 + $0x28] sm:%s69] %v98
              %v100 = vld [vmem:[%s76 + $0x58] sm:%s69]
              %101 = vst [vmem:[%s77 + $0x2c] sm:%s69] %v100
              %v102 = vld [vmem:[%s76 + $0x60] sm:%s69]
              %103 = vst [vmem:[%s77 + $0x30] sm:%s69] %v102
              %v104 = vld [vmem:[%s76 + $0x68] sm:%s69]
              %105 = vst [vmem:[%s77 + $0x34] sm:%s69] %v104
              %v106 = vld [vmem:[%s76 + $0x70] sm:%s69]
              %107 = vst [vmem:[%s77 + $0x38] sm:%s69] %v106
              %v108 = vld [vmem:[%s76 + $0x78] sm:%s69]
              %109 = vst [vmem:[%s77 + $0x3c] sm:%s69] %v108
            $region40: #{residual_block.5} parent=27 // loop_footer
              %s75 = sadd.s32 1, %s71
            $region41: #{residual_block.5} parent=27 // loop_footer_branch
              %70 = sbr.rel target = $region37
            $region42: #{residual_block.5} parent=27 // loop_exit
              _
          $region28: #{residual_block.5} parent=12 // pred_fallthru
            _
        $region13: #{residual_block.5} parent=8 // pred_fallthru
          _
        // Predicated region
        $region14: #{residual_block.5} parent=8 // pred_check
          _
        $region15: #{residual_block.5} parent=8 // pred_check_branch
          %15 = sbr.rel (0) target = $region17
        $region16: #{residual_block.5} parent=8 // pred_region
          %s17 = ssub.s32 16, 1
          loop: start=0, step=1, limit=1
          $region18: #{residual_block.5} parent=16 // loop_pre_header
            _
          $region19: #{residual_block.5} parent=16 // loop_header
            %s19 = sphi 0, %s23
            %p20 = scmp.ge.s32.totalorder %s19, 1
            %s24 = sphi %s0, %s0
            %s25 = sphi [#allocation2], [#allocation2]
          $region20: #{residual_block.5} parent=16 // loop_header_branch
            %22 = sbr.rel (%p20) target = $region24
          $region21: #{residual_block.5} parent=16 // loop_body
            %v26 = vld [vmem:[%s24] sm:%s17]
            %27 = vst [vmem:[%s25] sm:%s17] %v26
            %v28 = vld [vmem:[%s24 + $0x8] sm:%s17]
            %29 = vst [vmem:[%s25 + $0x4] sm:%s17] %v28
            %v30 = vld [vmem:[%s24 + $0x10] sm:%s17]
            %31 = vst [vmem:[%s25 + $0x8] sm:%s17] %v30
            %v32 = vld [vmem:[%s24 + $0x18] sm:%s17]
            %33 = vst [vmem:[%s25 + $0xc] sm:%s17] %v32
            %v34 = vld [vmem:[%s24 + $0x20] sm:%s17]
            %35 = vst [vmem:[%s25 + $0x10] sm:%s17] %v34
            %v36 = vld [vmem:[%s24 + $0x28] sm:%s17]
            %37 = vst [vmem:[%s25 + $0x14] sm:%s17] %v36
            %v38 = vld [vmem:[%s24 + $0x30] sm:%s17]
            %39 = vst [vmem:[%s25 + $0x18] sm:%s17] %v38
            %v40 = vld [vmem:[%s24 + $0x38] sm:%s17]
            %41 = vst [vmem:[%s25 + $0x1c] sm:%s17] %v40
            %v42 = vld [vmem:[%s24 + $0x40] sm:%s17]
            %43 = vst [vmem:[%s25 + $0x20] sm:%s17] %v42
            %v44 = vld [vmem:[%s24 + $0x48] sm:%s17]
            %45 = vst [vmem:[%s25 + $0x24] sm:%s17] %v44
            %v46 = vld [vmem:[%s24 + $0x50] sm:%s17]
            %47 = vst [vmem:[%s25 + $0x28] sm:%s17] %v46
            %v48 = vld [vmem:[%s24 + $0x58] sm:%s17]
            %49 = vst [vmem:[%s25 + $0x2c] sm:%s17] %v48
            %v50 = vld [vmem:[%s24 + $0x60] sm:%s17]
            %51 = vst [vmem:[%s25 + $0x30] sm:%s17] %v50
            %v52 = vld [vmem:[%s24 + $0x68] sm:%s17]
            %53 = vst [vmem:[%s25 + $0x34] sm:%s17] %v52
            %v54 = vld [vmem:[%s24 + $0x70] sm:%s17]
            %55 = vst [vmem:[%s25 + $0x38] sm:%s17] %v54
            %v56 = vld [vmem:[%s24 + $0x78] sm:%s17]
            %57 = vst [vmem:[%s25 + $0x3c] sm:%s17] %v56
          $region22: #{residual_block.5} parent=16 // loop_footer
            %s23 = sadd.s32 1, %s19
          $region23: #{residual_block.5} parent=16 // loop_footer_branch
            %18 = sbr.rel target = $region19
          $region24: #{residual_block.5} parent=16 // loop_exit
            _
        $region17: #{residual_block.5} parent=8 // pred_fallthru
          _
      $region9: #{residual_block.5} parent=4 // pred_fallthru
        _
      %110 = vnop
    $region5: #{residual_block.5} parent=1 // pred_fallthru
      _
    // Predicated region
    $region43: #{residual_block.5} parent=1 // pred_check
      _
    $region44: #{residual_block.5} parent=1 // pred_check_branch
      %112 = sbr.rel (0) target = $region46
    $region45: #{residual_block.5} parent=1 // pred_region
      _
    $region46: #{residual_block.5} parent=1 // pred_fallthru
      _
    // Predicated region
    $region47: #{residual_block.5} parent=1 // pred_check
      _
    $region48: #{residual_block.5} parent=1 // pred_check_branch
      %114 = sbr.rel (0) target = $region50
    $region49: #{residual_block.5} parent=1 // pred_region
      _
    $region50: #{residual_block.5} parent=1 // pred_fallthru
      _
    // Predicated region
    $region51: #{residual_block.5} parent=1 // pred_check
      _
    $region52: #{residual_block.5} parent=1 // pred_check_branch
      %116 = sbr.rel (0) target = $region54
    $region53: #{residual_block.5} parent=1 // pred_region
      _
    $region54: #{residual_block.5} parent=1 // pred_fallthru
      _
    %v117 = vld [vmem:[#allocation2] sm:$0xf]
    %v118 = vld [vmem:[#allocation2 + $0x4] sm:$0xf]
    %v119 = vld [vmem:[#allocation2 + $0x8] sm:$0xf]
    %v120 = vld [vmem:[#allocation2 + $0xc] sm:$0xf]
    %v121 = vld [vmem:[#allocation2 + $0x10] sm:$0xf]
    %v122 = vld [vmem:[#allocation2 + $0x14] sm:$0xf]
    %v123 = vld [vmem:[#allocation2 + $0x18] sm:$0xf]
    %v124 = vld [vmem:[#allocation2 + $0x1c] sm:$0xf]
    %v125 = vld [vmem:[#allocation2 + $0x20] sm:$0xf]
    %v126 = vld [vmem:[#allocation2 + $0x24] sm:$0xf]
    %v127 = vld [vmem:[#allocation2 + $0x28] sm:$0xf]
    %v128 = vld [vmem:[#allocation2 + $0x2c] sm:$0xf]
    %v129 = vld [vmem:[#allocation2 + $0x30] sm:$0xf]
    %v130 = vld [vmem:[#allocation2 + $0x34] sm:$0xf]
    %v131 = vld [vmem:[#allocation2 + $0x38] sm:$0xf]
    %v132 = vld [vmem:[#allocation2 + $0x3c] sm:$0xf]
    %v133 = vunpack.c.l.bf16 %v117
    %v134 = vunpack.c.l.bf16 %v118
    %v135 = vunpack.c.l.bf16 %v119
    %v136 = vunpack.c.l.bf16 %v120
    %v137 = vunpack.c.l.bf16 %v121
    %v138 = vunpack.c.l.bf16 %v122
    %v139 = vunpack.c.l.bf16 %v123
    %v140 = vunpack.c.l.bf16 %v124
    %v141 = vunpack.c.l.bf16 %v125
    %v142 = vunpack.c.l.bf16 %v126
    %v143 = vunpack.c.l.bf16 %v127
    %v144 = vunpack.c.l.bf16 %v128
    %v145 = vunpack.c.l.bf16 %v129
    %v146 = vunpack.c.l.bf16 %v130
    %v147 = vunpack.c.l.bf16 %v131
    %v148 = vunpack.c.l.bf16 %v132
    %v149 = vld [vmem:[%s1] sm:$0x1]
    %v151 = vlaneseq
    %v152 = vshrl.u32 %v151, 7
    %v153 = vsub.s32 0, %v152
    %v154 = vrot.slane %v149, %v153
    %v156 = vmul.f32 %v133, %v154
    %v157 = vmul.f32 %v134, %v154
    %v158 = vmul.f32 %v135, %v154
    %v159 = vmul.f32 %v136, %v154
    %v160 = vmul.f32 %v137, %v154
    %v161 = vmul.f32 %v138, %v154
    %v162 = vmul.f32 %v139, %v154
    %v163 = vmul.f32 %v140, %v154
    %v164 = vmul.f32 %v141, %v154
    %v165 = vmul.f32 %v142, %v154
    %v166 = vmul.f32 %v143, %v154
    %v167 = vmul.f32 %v144, %v154
    %v168 = vmul.f32 %v145, %v154
    %v169 = vmul.f32 %v146, %v154
    %v170 = vmul.f32 %v147, %v154
    %v171 = vmul.f32 %v148, %v154
    %v172 = vld [vmem:[%s2] sm:$0x1]
    %v174 = vlaneseq
    %v175 = vshrl.u32 %v174, 7
    %v176 = vsub.s32 0, %v175
    %v177 = vrot.slane %v172, %v176
    %v179 = vadd.f32 %v156, %v177
    %v180 = vadd.f32 %v157, %v177
    %v181 = vadd.f32 %v158, %v177
    %v182 = vadd.f32 %v159, %v177
    %v183 = vadd.f32 %v160, %v177
    %v184 = vadd.f32 %v161, %v177
    %v185 = vadd.f32 %v162, %v177
    %v186 = vadd.f32 %v163, %v177
    %v187 = vadd.f32 %v164, %v177
    %v188 = vadd.f32 %v165, %v177
    %v189 = vadd.f32 %v166, %v177
    %v190 = vadd.f32 %v167, %v177
    %v191 = vadd.f32 %v168, %v177
    %v192 = vadd.f32 %v169, %v177
    %v193 = vadd.f32 %v170, %v177
    %v194 = vadd.f32 %v171, %v177
    %v195 = vmax.f32 %v179, 0.0
    %v196 = vmax.f32 %v180, 0.0
    %v197 = vmax.f32 %v181, 0.0
    %v198 = vmax.f32 %v182, 0.0
    %v199 = vmax.f32 %v183, 0.0
    %v200 = vmax.f32 %v184, 0.0
    %v201 = vmax.f32 %v185, 0.0
    %v202 = vmax.f32 %v186, 0.0
    %v203 = vmax.f32 %v187, 0.0
    %v204 = vmax.f32 %v188, 0.0
    %v205 = vmax.f32 %v189, 0.0
    %v206 = vmax.f32 %v190, 0.0
    %v207 = vmax.f32 %v191, 0.0
    %v208 = vmax.f32 %v192, 0.0
    %v209 = vmax.f32 %v193, 0.0
    %v210 = vmax.f32 %v194, 0.0
    %v211 = vpack.c.bf16 %v196, %v195
    %v212 = vpack.c.bf16 %v198, %v197
    %v213 = vpack.c.bf16 %v200, %v199
    %v214 = vpack.c.bf16 %v202, %v201
    %v215 = vpack.c.bf16 %v204, %v203
    %v216 = vpack.c.bf16 %v206, %v205
    %v217 = vpack.c.bf16 %v208, %v207
    %v218 = vpack.c.bf16 %v210, %v209
    %v227 = vunpack.c.l.b16 %v211
    %v228 = vunpack.c.h.b16 %v211
    %v229 = vunpack.c.l.b16 %v212
    %v230 = vunpack.c.h.b16 %v212
    %v231 = vunpack.c.l.b16 %v213
    %v232 = vunpack.c.h.b16 %v213
    %v233 = vunpack.c.l.b16 %v214
    %v234 = vunpack.c.h.b16 %v214
    %v235 = vunpack.c.l.b16 %v215
    %v236 = vunpack.c.h.b16 %v215
    %v237 = vunpack.c.l.b16 %v216
    %v238 = vunpack.c.h.b16 %v216
    %v239 = vunpack.c.l.b16 %v217
    %v240 = vunpack.c.h.b16 %v217
    %v241 = vunpack.c.l.b16 %v218
    %v242 = vunpack.c.h.b16 %v218
    %v243 = vpack.c.b16 %v227, %v227
    %v244 = vpack.c.b16 %v228, %v228
    %v245 = vpack.c.b16 %v229, %v229
    %v246 = vpack.c.b16 %v230, %v230
    %v247 = vpack.c.b16 %v231, %v231
    %v248 = vpack.c.b16 %v232, %v232
    %v249 = vpack.c.b16 %v233, %v233
    %v250 = vpack.c.b16 %v234, %v234
    %v251 = vpack.c.b16 %v235, %v235
    %v252 = vpack.c.b16 %v236, %v236
    %v253 = vpack.c.b16 %v237, %v237
    %v254 = vpack.c.b16 %v238, %v238
    %v255 = vpack.c.b16 %v239, %v239
    %v256 = vpack.c.b16 %v240, %v240
    %v257 = vpack.c.b16 %v241, %v241
    %v258 = vpack.c.b16 %v242, %v242
    %275 = vst [vmem:[%s3] sm:$0xf] %v243
    %276 = vst [vmem:[%s3 + $0x4] sm:$0xf] %v244
    %277 = vst [vmem:[%s3 + $0x8] sm:$0xf] %v245
    %278 = vst [vmem:[%s3 + $0xc] sm:$0xf] %v246
    %279 = vst [vmem:[%s3 + $0x10] sm:$0xf] %v247
    %280 = vst [vmem:[%s3 + $0x14] sm:$0xf] %v248
    %281 = vst [vmem:[%s3 + $0x18] sm:$0xf] %v249
    %282 = vst [vmem:[%s3 + $0x1c] sm:$0xf] %v250
    %283 = vst [vmem:[%s3 + $0x20] sm:$0xf] %v251
    %284 = vst [vmem:[%s3 + $0x24] sm:$0xf] %v252
    %285 = vst [vmem:[%s3 + $0x28] sm:$0xf] %v253
    %286 = vst [vmem:[%s3 + $0x2c] sm:$0xf] %v254
    %287 = vst [vmem:[%s3 + $0x30] sm:$0xf] %v255
    %288 = vst [vmem:[%s3 + $0x34] sm:$0xf] %v256
    %289 = vst [vmem:[%s3 + $0x38] sm:$0xf] %v257
    %290 = vst [vmem:[%s3 + $0x3c] sm:$0xf] %v258
    // Predicated region
    $region55: #{residual_block.5} parent=1 // pred_check
      _
    $region56: #{residual_block.5} parent=1 // pred_check_branch
      %292 = sbr.rel (0) target = $region58
    $region57: #{residual_block.5} parent=1 // pred_region
      _
    $region58: #{residual_block.5} parent=1 // pred_fallthru
      _
    // Predicated region
    $region59: #{residual_block.5} parent=1 // pred_check
      _
    $region60: #{residual_block.5} parent=1 // pred_check_branch
      %294 = sbr.rel (0) target = $region62
    $region61: #{residual_block.5} parent=1 // pred_region
      _
    $region62: #{residual_block.5} parent=1 // pred_fallthru
      _

// kernel: residual_block.6
$region0: #{residual_block.6}
  #allocation0 [shape = 'u32[]', space=smem, size = 0x4, offset = 0x4, fixed_abs, tag = 'smem constant byte address 0x4 - core index']
  #allocation1 [shape = 'u32[144,128]{1,0:T(1,128)}', space=vmem, size = 0x12000, scoped, tag = 'internal scratch']
  %s0 = inlined_call_operand.vmem [shape: bf16[128,128], index: 0, kind: input, shape index: {}]
  %s1 = inlined_call_operand.vmem [shape: bf16[128,128], index: 1, kind: input, shape index: {}]
  %s2 = inlined_call_operand.vmem [shape: bf16[128,128], index: 2, kind: output, shape index: {0}]
  %s3 = inlined_call_operand.vmem [shape: f32[1,8,128], index: 3, kind: output, shape index: {1}]
  %s4 = inlined_call_operand.vmem [shape: f32[1,8,128], index: 4, kind: output, shape index: {2}]
  %5 = xla_tuple %s2, %s3, %s4
  %s6 = sld [smem:[#allocation0]]
  $region34: #{residual_block.6} parent=0
    _
  %s8 = ssub.s32 1, %s6
  %s9 = scalar_select 0, %s8, %s6
  // Predicated region
  $region2: #{residual_block.6} parent=0 // pred_check
    _
  $region3: #{residual_block.6} parent=0 // pred_check_branch
    %11 = sbr.rel (0) target = $region5
  $region4: #{residual_block.6} parent=0 // pred_region
    _
  $region5: #{residual_block.6} parent=0 // pred_fallthru
    _
  // Predicated region
  $region6: #{residual_block.6} parent=0 // pred_check
    _
  $region7: #{residual_block.6} parent=0 // pred_check_branch
    %13 = sbr.rel (0) target = $region9
  $region8: #{residual_block.6} parent=0 // pred_region
    _
  $region9: #{residual_block.6} parent=0 // pred_fallthru
    _
  %v15 = vld [vmem:[%s0] sm:$0xf]
  %v16 = vld [vmem:[%s0 + $0x4] sm:$0xf]
  %v17 = vld [vmem:[%s0 + $0x8] sm:$0xf]
  %v18 = vld [vmem:[%s0 + $0xc] sm:$0xf]
  %v19 = vld [vmem:[%s0 + $0x10] sm:$0xf]
  %v20 = vld [vmem:[%s0 + $0x14] sm:$0xf]
  %v21 = vld [vmem:[%s0 + $0x18] sm:$0xf]
  %v22 = vld [vmem:[%s0 + $0x1c] sm:$0xf]
  %v23 = vld [vmem:[%s0 + $0x20] sm:$0xf]
  %v24 = vld [vmem:[%s0 + $0x24] sm:$0xf]
  %v25 = vld [vmem:[%s0 + $0x28] sm:$0xf]
  %v26 = vld [vmem:[%s0 + $0x2c] sm:$0xf]
  %v27 = vld [vmem:[%s0 + $0x30] sm:$0xf]
  %v28 = vld [vmem:[%s0 + $0x34] sm:$0xf]
  %v29 = vld [vmem:[%s0 + $0x38] sm:$0xf]
  %v30 = vld [vmem:[%s0 + $0x3c] sm:$0xf]
  %v31 = vld [vmem:[%s1] sm:$0xf]
  %v32 = vld [vmem:[%s1 + $0x4] sm:$0xf]
  %v33 = vld [vmem:[%s1 + $0x8] sm:$0xf]
  %v34 = vld [vmem:[%s1 + $0xc] sm:$0xf]
  %v35 = vld [vmem:[%s1 + $0x10] sm:$0xf]
  %v36 = vld [vmem:[%s1 + $0x14] sm:$0xf]
  %v37 = vld [vmem:[%s1 + $0x18] sm:$0xf]
  %v38 = vld [vmem:[%s1 + $0x1c] sm:$0xf]
  %v39 = vld [vmem:[%s1 + $0x20] sm:$0xf]
  %v40 = vld [vmem:[%s1 + $0x24] sm:$0xf]
  %v41 = vld [vmem:[%s1 + $0x28] sm:$0xf]
  %v42 = vld [vmem:[%s1 + $0x2c] sm:$0xf]
  %v43 = vld [vmem:[%s1 + $0x30] sm:$0xf]
  %v44 = vld [vmem:[%s1 + $0x34] sm:$0xf]
  %v45 = vld [vmem:[%s1 + $0x38] sm:$0xf]
  %v46 = vld [vmem:[%s1 + $0x3c] sm:$0xf]
  %v63 = vunpack.c.l.b16 %v15
  %v64 = vunpack.c.l.b16 %v16
  %v65 = vunpack.c.l.b16 %v17
  %v66 = vunpack.c.l.b16 %v18
  %v67 = vunpack.c.l.b16 %v19
  %v68 = vunpack.c.l.b16 %v20
  %v69 = vunpack.c.l.b16 %v21
  %v70 = vunpack.c.l.b16 %v22
  %v71 = vunpack.c.l.b16 %v23
  %v72 = vunpack.c.l.b16 %v24
  %v73 = vunpack.c.l.b16 %v25
  %v74 = vunpack.c.l.b16 %v26
  %v75 = vunpack.c.l.b16 %v27
  %v76 = vunpack.c.l.b16 %v28
  %v77 = vunpack.c.l.b16 %v29
  %v78 = vunpack.c.l.b16 %v30
  %v79 = vpack.c.b16 %v64, %v63
  %v80 = vpack.c.b16 %v66, %v65
  %v81 = vpack.c.b16 %v68, %v67
  %v82 = vpack.c.b16 %v70, %v69
  %v83 = vpack.c.b16 %v72, %v71
  %v84 = vpack.c.b16 %v74, %v73
  %v85 = vpack.c.b16 %v76, %v75
  %v86 = vpack.c.b16 %v78, %v77
  %v111 = vunpack.c.l.b16 %v31
  %v112 = vunpack.c.l.b16 %v32
  %v113 = vunpack.c.l.b16 %v33
  %v114 = vunpack.c.l.b16 %v34
  %v115 = vunpack.c.l.b16 %v35
  %v116 = vunpack.c.l.b16 %v36
  %v117 = vunpack.c.l.b16 %v37
  %v118 = vunpack.c.l.b16 %v38
  %v119 = vunpack.c.l.b16 %v39
  %v120 = vunpack.c.l.b16 %v40
  %v121 = vunpack.c.l.b16 %v41
  %v122 = vunpack.c.l.b16 %v42
  %v123 = vunpack.c.l.b16 %v43
  %v124 = vunpack.c.l.b16 %v44
  %v125 = vunpack.c.l.b16 %v45
  %v126 = vunpack.c.l.b16 %v46
  %v127 = vpack.c.b16 %v112, %v111
  %v128 = vpack.c.b16 %v114, %v113
  %v129 = vpack.c.b16 %v116, %v115
  %v130 = vpack.c.b16 %v118, %v117
  %v131 = vpack.c.b16 %v120, %v119
  %v132 = vpack.c.b16 %v122, %v121
  %v133 = vpack.c.b16 %v124, %v123
  %v134 = vpack.c.b16 %v126, %v125
  %143 = vmatprep.subr.bf16.mxu0 0
  %144 = vmatpush1.bf16.msra.mxu0 %v134
  %145 = vmatprep.subr.bf16.mxu0 0
  %146 = vmatpush1.bf16.msra.mxu0 %v133
  %147 = vmatprep.subr.bf16.mxu0 0
  %148 = vmatpush1.bf16.msra.mxu0 %v132
  %149 = vmatprep.subr.bf16.mxu0 0
  %150 = vmatpush1.bf16.msra.mxu0 %v131
  %151 = vmatprep.subr.bf16.mxu0 0
  %152 = vmatpush1.bf16.msra.mxu0 %v130
  %153 = vmatprep.subr.bf16.mxu0 0
  %154 = vmatpush1.bf16.msra.mxu0 %v129
  %155 = vmatprep.subr.bf16.mxu0 0
  %156 = vmatpush1.bf16.msra.mxu0 %v128
  %157 = vmatprep.subr.bf16.mxu0 0
  %158 = vmatpush1.bf16.msra.mxu0 %v127
  %159 = vmatprep.subr.bf16.mxu0 0
  %160 = vmatpush2.bf16.msra.mxu0 0
  %161 = vmatprep.subr.bf16.mxu0 0
  %162 = vmatpush2.bf16.msra.mxu0 0
  %163 = vmatprep.subr.bf16.mxu0 0
  %164 = vmatpush2.bf16.msra.mxu0 0
  %165 = vmatprep.subr.bf16.mxu0 0
  %166 = vmatpush2.bf16.msra.mxu0 0
  %167 = vmatprep.subr.bf16.mxu0 0
  %168 = vmatpush2.bf16.msra.mxu0 0
  %169 = vmatprep.subr.bf16.mxu0 0
  %170 = vmatpush2.bf16.msra.mxu0 0
  %171 = vmatprep.subr.bf16.mxu0 0
  %172 = vmatpush2.bf16.msra.mxu0 0
  %173 = vmatprep.subr.bf16.mxu0 0
  %174 = vmatpush2.bf16.msra.mxu0 0
  %175 = vmatprep.mubr.bf16.mxu0 0
  %176 = vmatmul.mubr.bf16.gmra.mxu0 %v79
  %v177 = vpop.f32.mrf.mxu0
  %v178 = vadd.f32 0.0, %v177
  %v179 = vpop.f32.mrf.mxu0
  %v180 = vpop.f32.mrf.mxu0
  %v181 = vadd.f32 0.0, %v180
  %v182 = vpop.f32.mrf.mxu0
  %183 = vmatprep.mubr.bf16.mxu0 0
  %184 = vmatmul.mubr.bf16.gmra.mxu0 %v80
  %v185 = vpop.f32.mrf.mxu0
  %v186 = vadd.f32 0.0, %v185
  %v187 = vpop.f32.mrf.mxu0
  %v188 = vpop.f32.mrf.mxu0
  %v189 = vadd.f32 0.0, %v188
  %v190 = vpop.f32.mrf.mxu0
  %191 = vmatprep.mubr.bf16.mxu0 0
  %192 = vmatmul.mubr.bf16.gmra.mxu0 %v81
  %v193 = vpop.f32.mrf.mxu0
  %v194 = vadd.f32 0.0, %v193
  %v195 = vpop.f32.mrf.mxu0
  %v196 = vpop.f32.mrf.mxu0
  %v197 = vadd.f32 0.0, %v196
  %v198 = vpop.f32.mrf.mxu0
  %199 = vmatprep.mubr.bf16.mxu0 0
  %200 = vmatmul.mubr.bf16.gmra.mxu0 %v82
  %v201 = vpop.f32.mrf.mxu0
  %v202 = vadd.f32 0.0, %v201
  %v203 = vpop.f32.mrf.mxu0
  %v204 = vpop.f32.mrf.mxu0
  %v205 = vadd.f32 0.0, %v204
  %v206 = vpop.f32.mrf.mxu0
  %207 = vmatprep.mubr.bf16.mxu0 0
  %208 = vmatmul.mubr.bf16.gmra.mxu0 %v83
  %v209 = vpop.f32.mrf.mxu0
  %v210 = vadd.f32 0.0, %v209
  %v211 = vpop.f32.mrf.mxu0
  %v212 = vpop.f32.mrf.mxu0
  %v213 = vadd.f32 0.0, %v212
  %v214 = vpop.f32.mrf.mxu0
  %215 = vmatprep.mubr.bf16.mxu0 0
  %216 = vmatmul.mubr.bf16.gmra.mxu0 %v84
  %v217 = vpop.f32.mrf.mxu0
  %v218 = vadd.f32 0.0, %v217
  %v219 = vpop.f32.mrf.mxu0
  %v220 = vpop.f32.mrf.mxu0
  %v221 = vadd.f32 0.0, %v220
  %v222 = vpop.f32.mrf.mxu0
  %223 = vmatprep.mubr.bf16.mxu0 0
  %224 = vmatmul.mubr.bf16.gmra.mxu0 %v85
  %v225 = vpop.f32.mrf.mxu0
  %v226 = vadd.f32 0.0, %v225
  %v227 = vpop.f32.mrf.mxu0
  %v228 = vpop.f32.mrf.mxu0
  %v229 = vadd.f32 0.0, %v228
  %v230 = vpop.f32.mrf.mxu0
  %231 = vmatprep.mubr.bf16.mxu0 0
  %232 = vmatmul.mubr.bf16.gmra.mxu0 %v86
  %v233 = vpop.f32.mrf.mxu0
  %v234 = vadd.f32 0.0, %v233
  %v235 = vpop.f32.mrf.mxu0
  %v236 = vpop.f32.mrf.mxu0
  %v237 = vadd.f32 0.0, %v236
  %v238 = vpop.f32.mrf.mxu0
  %239 = vdwg.mxu0
  %v240 = vpack.c.bf16 %v181, %v178
  %v241 = vpack.c.bf16 %v189, %v186
  %v242 = vpack.c.bf16 %v197, %v194
  %v243 = vpack.c.bf16 %v205, %v202
  %v244 = vpack.c.bf16 %v213, %v210
  %v245 = vpack.c.bf16 %v221, %v218
  %v246 = vpack.c.bf16 %v229, %v226
  %v247 = vpack.c.bf16 %v237, %v234
  %v256 = vunpack.c.l.b16 %v240
  %v257 = vunpack.c.h.b16 %v240
  %v258 = vunpack.c.l.b16 %v241
  %v259 = vunpack.c.h.b16 %v241
  %v260 = vunpack.c.l.b16 %v242
  %v261 = vunpack.c.h.b16 %v242
  %v262 = vunpack.c.l.b16 %v243
  %v263 = vunpack.c.h.b16 %v243
  %v264 = vunpack.c.l.b16 %v244
  %v265 = vunpack.c.h.b16 %v244
  %v266 = vunpack.c.l.b16 %v245
  %v267 = vunpack.c.h.b16 %v245
  %v268 = vunpack.c.l.b16 %v246
  %v269 = vunpack.c.h.b16 %v246
  %v270 = vunpack.c.l.b16 %v247
  %v271 = vunpack.c.h.b16 %v247
  %v272 = vpack.c.b16 %v256, %v256
  %v273 = vpack.c.b16 %v257, %v257
  %v274 = vpack.c.b16 %v258, %v258
  %v275 = vpack.c.b16 %v259, %v259
  %v276 = vpack.c.b16 %v260, %v260
  %v277 = vpack.c.b16 %v261, %v261
  %v278 = vpack.c.b16 %v262, %v262
  %v279 = vpack.c.b16 %v263, %v263
  %v280 = vpack.c.b16 %v264, %v264
  %v281 = vpack.c.b16 %v265, %v265
  %v282 = vpack.c.b16 %v266, %v266
  %v283 = vpack.c.b16 %v267, %v267
  %v284 = vpack.c.b16 %v268, %v268
  %v285 = vpack.c.b16 %v269, %v269
  %v286 = vpack.c.b16 %v270, %v270
  %v287 = vpack.c.b16 %v271, %v271
  %304 = vst [vmem:[%s2] sm:$0xf] %v272
  %305 = vst [vmem:[%s2 + $0x4] sm:$0xf] %v273
  %306 = vst [vmem:[%s2 + $0x8] sm:$0xf] %v274
  %307 = vst [vmem:[%s2 + $0xc] sm:$0xf] %v275
  %308 = vst [vmem:[%s2 + $0x10] sm:$0xf] %v276
  %309 = vst [vmem:[%s2 + $0x14] sm:$0xf] %v277
  %310 = vst [vmem:[%s2 + $0x18] sm:$0xf] %v278
  %311 = vst [vmem:[%s2 + $0x1c] sm:$0xf] %v279
  %312 = vst [vmem:[%s2 + $0x20] sm:$0xf] %v280
  %313 = vst [vmem:[%s2 + $0x24] sm:$0xf] %v281
  %314 = vst [vmem:[%s2 + $0x28] sm:$0xf] %v282
  %315 = vst [vmem:[%s2 + $0x2c] sm:$0xf] %v283
  %316 = vst [vmem:[%s2 + $0x30] sm:$0xf] %v284
  %317 = vst [vmem:[%s2 + $0x34] sm:$0xf] %v285
  %318 = vst [vmem:[%s2 + $0x38] sm:$0xf] %v286
  %319 = vst [vmem:[%s2 + $0x3c] sm:$0xf] %v287
  %v320 = vadd.f32 %v178, %v181
  %v321 = vadd.f32 %v320, %v186
  %v322 = vadd.f32 %v321, %v189
  %v323 = vadd.f32 %v322, %v194
  %v324 = vadd.f32 %v323, %v197
  %v325 = vadd.f32 %v324, %v202
  %v326 = vadd.f32 %v325, %v205
  %v327 = vadd.f32 %v326, %v210
  %v328 = vadd.f32 %v327, %v213
  %v329 = vadd.f32 %v328, %v218
  %v330 = vadd.f32 %v329, %v221
  %v331 = vadd.f32 %v330, %v226
  %v332 = vadd.f32 %v331, %v229
  %v333 = vadd.f32 %v332, %v234
  %v334 = vadd.f32 %v333, %v237
  %v335 = vrot.slane %v334, 4
  %v336 = vadd.f32 %v334, %v335
  %v337 = vrot.slane %v336, 2
  %v338 = vadd.f32 %v336, %v337
  %v339 = vrot.slane %v338, 1
  %v340 = vadd.f32 %v338, %v339
  %v341 = vmul.f32 %v178, %v178
  %v342 = vmul.f32 %v181, %v181
  %v343 = vmul.f32 %v186, %v186
  %v344 = vmul.f32 %v189, %v189
  %v345 = vmul.f32 %v194, %v194
  %v346 = vmul.f32 %v197, %v197
  %v347 = vmul.f32 %v202, %v202
  %v348 = vmul.f32 %v205, %v205
  %v349 = vmul.f32 %v210, %v210
  %v350 = vmul.f32 %v213, %v213
  %v351 = vmul.f32 %v218, %v218
  %v352 = vmul.f32 %v221, %v221
  %v353 = vmul.f32 %v226, %v226
  %v354 = vmul.f32 %v229, %v229
  %v355 = vmul.f32 %v234, %v234
  %v356 = vmul.f32 %v237, %v237
  %v357 = vadd.f32 %v341, %v342
  %v358 = vadd.f32 %v357, %v343
  %v359 = vadd.f32 %v358, %v344
  %v360 = vadd.f32 %v359, %v345
  %v361 = vadd.f32 %v360, %v346
  %v362 = vadd.f32 %v361, %v347
  %v363 = vadd.f32 %v362, %v348
  %v364 = vadd.f32 %v363, %v349
  %v365 = vadd.f32 %v364, %v350
  %v366 = vadd.f32 %v365, %v351
  %v367 = vadd.f32 %v366, %v352
  %v368 = vadd.f32 %v367, %v353
  %v369 = vadd.f32 %v368, %v354
  %v370 = vadd.f32 %v369, %v355
  %v371 = vadd.f32 %v370, %v356
  %v372 = vrot.slane %v371, 4
  %v373 = vadd.f32 %v371, %v372
  %v374 = vrot.slane %v373, 2
  %v375 = vadd.f32 %v373, %v374
  %v376 = vrot.slane %v375, 1
  %v377 = vadd.f32 %v375, %v376
  %378 = vst [vmem:[%s3] sm:$0xff] %v340
  %379 = vst [vmem:[%s4] sm:$0xff] %v377
  // Predicated region
  $region10: #{residual_block.6} parent=0 // pred_check
    _
  $region11: #{residual_block.6} parent=0 // pred_check_branch
    %381 = sbr.rel (0) target = $region13
  $region12: #{residual_block.6} parent=0 // pred_region
    _
  $region13: #{residual_block.6} parent=0 // pred_fallthru
    _
  // Predicated region
  $region14: #{residual_block.6} parent=0 // pred_check
    _
  $region15: #{residual_block.6} parent=0 // pred_check_branch
    %383 = sbr.rel (0) target = $region17
  $region16: #{residual_block.6} parent=0 // pred_region
    _
  $region17: #{residual_block.6} parent=0 // pred_fallthru
    _
  // Predicated region
  $region18: #{residual_block.6} parent=0 // pred_check
    _
  $region19: #{residual_block.6} parent=0 // pred_check_branch
    %385 = sbr.rel (0) target = $region21
  $region20: #{residual_block.6} parent=0 // pred_region
    _
  $region21: #{residual_block.6} parent=0 // pred_fallthru
    _
  // Predicated region
  $region22: #{residual_block.6} parent=0 // pred_check
    _
  $region23: #{residual_block.6} parent=0 // pred_check_branch
    %387 = sbr.rel (0) target = $region25
  $region24: #{residual_block.6} parent=0 // pred_region
    _
  $region25: #{residual_block.6} parent=0 // pred_fallthru
    _
  // Predicated region
  $region26: #{residual_block.6} parent=0 // pred_check
    _
  $region27: #{residual_block.6} parent=0 // pred_check_branch
    %389 = sbr.rel (0) target = $region29
  $region28: #{residual_block.6} parent=0 // pred_region
    _
  $region29: #{residual_block.6} parent=0 // pred_fallthru
    _
  // Predicated region
  $region30: #{residual_block.6} parent=0 // pred_check
    _
  $region31: #{residual_block.6} parent=0 // pred_check_branch
    %391 = sbr.rel (0) target = $region33
  $region32: #{residual_block.6} parent=0 // pred_region
    _
  $region33: #{residual_block.6} parent=0 // pred_fallthru
    _

// kernel: residual_block.7
$region0: #{residual_block.7}
  #allocation0 [shape = 'u32[]', space=smem, size = 0x4, offset = 0x4, fixed_abs, tag = 'smem constant byte address 0x4 - core index']
  #allocation1 [shape = 'u32[144,128]{1,0:T(1,128)}', space=vmem, size = 0x12000, scoped, tag = 'internal scratch']
  %s0 = inlined_call_operand.vmem [shape: bf16[128,128], index: 0, kind: input, shape index: {}]
  %s1 = inlined_call_operand.vmem [shape: bf16[128,256], index: 1, kind: input, shape index: {}]
  %s2 = inlined_call_operand.vmem [shape: f32[1,128], index: 2, kind: input, shape index: {}]
  %s3 = inlined_call_operand.vmem [shape: f32[1,128], index: 3, kind: input, shape index: {}]
  %s4 = inlined_call_operand.vmem [shape: f32[1,128], index: 4, kind: input, shape index: {}]
  %s5 = inlined_call_operand.vmem [shape: f32[1,128], index: 5, kind: input, shape index: {}]
  %s6 = inlined_call_operand.vmem [shape: f32[128,128], index: 6, kind: output, shape index: {}]
  %s7 = sld [smem:[#allocation0]]
  $region75: #{residual_block.7} parent=0
    _
  %s9 = ssub.s32 1, %s7
  %s10 = scalar_select 0, %s9, %s7
  $region1: #{residual_block.7} parent=0
    #allocation2 [shape = 'u8[32768]{0}', space=vmem, size = 0x8000, scoped, tag = 'input window, operand 1, single buffered']
    // Predicated region
    $region2: #{residual_block.7} parent=1 // pred_check
      _
    $region3: #{residual_block.7} parent=1 // pred_check_branch
      %12 = sbr.rel (0) target = $region5
    $region4: #{residual_block.7} parent=1 // pred_region
      _
    $region5: #{residual_block.7} parent=1 // pred_fallthru
      _
    // Predicated region
    $region6: #{residual_block.7} parent=1 // pred_check
      _
    $region7: #{residual_block.7} parent=1 // pred_check_branch
      %14 = sbr.rel (0) target = $region9
    $region8: #{residual_block.7} parent=1 // pred_region
      %s15 = scalar_lea.vmem %s1, 4
      // Predicated region
      $region10: #{residual_block.7} parent=8 // pred_check
        _
      $region11: #{residual_block.7} parent=8 // pred_check_branch
        %17 = sbr.rel (0) target = $region13
      $region12: #{residual_block.7} parent=8 // pred_region
        // Predicated region
        $region14: #{residual_block.7} parent=12 // pred_check
          _
        $region15: #{residual_block.7} parent=12 // pred_check_branch
          %19 = sbr.rel target = $region17
        $region16: #{residual_block.7} parent=12 // pred_region
          // Predicated region
          $region29: #{residual_block.7} parent=16 // pred_check
            _
          $region30: #{residual_block.7} parent=16 // pred_check_branch
            %65 = sbr.rel (0) target = $region32
          $region31: #{residual_block.7} parent=16 // pred_region
            loop: start=0, step=1, limit=1
            $region33: #{residual_block.7} parent=31 // loop_pre_header
              _
            $region34: #{residual_block.7} parent=31 // loop_header
              %s67 = sphi 0, %s71
              %p68 = scmp.ge.s32.totalorder %s67, 1
              %s72 = sphi %s15, %s15
              %s73 = sphi [#allocation2], [#allocation2]
            $region35: #{residual_block.7} parent=31 // loop_header_branch
              %70 = sbr.rel (%p68) target = $region39
            $region36: #{residual_block.7} parent=31 // loop_body
              _
            $region37: #{residual_block.7} parent=31 // loop_footer
              %s71 = sadd.s32 1, %s67
            $region38: #{residual_block.7} parent=31 // loop_footer_branch
              %66 = sbr.rel target = $region34
            $region39: #{residual_block.7} parent=31 // loop_exit
              _
            %s75 = ssub.s32 16, 1
            loop: start=0, step=1, limit=1
            $region40: #{residual_block.7} parent=31 // loop_pre_header
              _
            $region41: #{residual_block.7} parent=31 // loop_header
              %s77 = sphi 0, %s81
              %p78 = scmp.ge.s32.totalorder %s77, 1
              %s82 = sphi %s15, %s15
              %s83 = sphi [#allocation2], [#allocation2]
            $region42: #{residual_block.7} parent=31 // loop_header_branch
              %80 = sbr.rel (%p78) target = $region46
            $region43: #{residual_block.7} parent=31 // loop_body
              %v84 = vld [vmem:[%s82] sm:%s75]
              %85 = vst [vmem:[%s83] sm:%s75] %v84
              %v86 = vld [vmem:[%s82 + $0x8] sm:%s75]
              %87 = vst [vmem:[%s83 + $0x4] sm:%s75] %v86
              %v88 = vld [vmem:[%s82 + $0x10] sm:%s75]
              %89 = vst [vmem:[%s83 + $0x8] sm:%s75] %v88
              %v90 = vld [vmem:[%s82 + $0x18] sm:%s75]
              %91 = vst [vmem:[%s83 + $0xc] sm:%s75] %v90
              %v92 = vld [vmem:[%s82 + $0x20] sm:%s75]
              %93 = vst [vmem:[%s83 + $0x10] sm:%s75] %v92
              %v94 = vld [vmem:[%s82 + $0x28] sm:%s75]
              %95 = vst [vmem:[%s83 + $0x14] sm:%s75] %v94
              %v96 = vld [vmem:[%s82 + $0x30] sm:%s75]
              %97 = vst [vmem:[%s83 + $0x18] sm:%s75] %v96
              %v98 = vld [vmem:[%s82 + $0x38] sm:%s75]
              %99 = vst [vmem:[%s83 + $0x1c] sm:%s75] %v98
              %v100 = vld [vmem:[%s82 + $0x40] sm:%s75]
              %101 = vst [vmem:[%s83 + $0x20] sm:%s75] %v100
              %v102 = vld [vmem:[%s82 + $0x48] sm:%s75]
              %103 = vst [vmem:[%s83 + $0x24] sm:%s75] %v102
              %v104 = vld [vmem:[%s82 + $0x50] sm:%s75]
              %105 = vst [vmem:[%s83 + $0x28] sm:%s75] %v104
              %v106 = vld [vmem:[%s82 + $0x58] sm:%s75]
              %107 = vst [vmem:[%s83 + $0x2c] sm:%s75] %v106
              %v108 = vld [vmem:[%s82 + $0x60] sm:%s75]
              %109 = vst [vmem:[%s83 + $0x30] sm:%s75] %v108
              %v110 = vld [vmem:[%s82 + $0x68] sm:%s75]
              %111 = vst [vmem:[%s83 + $0x34] sm:%s75] %v110
              %v112 = vld [vmem:[%s82 + $0x70] sm:%s75]
              %113 = vst [vmem:[%s83 + $0x38] sm:%s75] %v112
              %v114 = vld [vmem:[%s82 + $0x78] sm:%s75]
              %115 = vst [vmem:[%s83 + $0x3c] sm:%s75] %v114
            $region44: #{residual_block.7} parent=31 // loop_footer
              %s81 = sadd.s32 1, %s77
            $region45: #{residual_block.7} parent=31 // loop_footer_branch
              %76 = sbr.rel target = $region41
            $region46: #{residual_block.7} parent=31 // loop_exit
              _
          $region32: #{residual_block.7} parent=16 // pred_fallthru
            _
        $region17: #{residual_block.7} parent=12 // pred_fallthru
          _
        // Predicated region
        $region18: #{residual_block.7} parent=12 // pred_check
          _
        $region19: #{residual_block.7} parent=12 // pred_check_branch
          %21 = sbr.rel (0) target = $region21
        $region20: #{residual_block.7} parent=12 // pred_region
          %s23 = ssub.s32 16, 1
          loop: start=0, step=1, limit=1
          $region22: #{residual_block.7} parent=20 // loop_pre_header
            _
          $region23: #{residual_block.7} parent=20 // loop_header
            %s25 = sphi 0, %s29
            %p26 = scmp.ge.s32.totalorder %s25, 1
            %s30 = sphi %s15, %s15
            %s31 = sphi [#allocation2], [#allocation2]
          $region24: #{residual_block.7} parent=20 // loop_header_branch
            %28 = sbr.rel (%p26) target = $region28
          $region25: #{residual_block.7} parent=20 // loop_body
            %v32 = vld [vmem:[%s30] sm:%s23]
            %33 = vst [vmem:[%s31] sm:%s23] %v32
            %v34 = vld [vmem:[%s30 + $0x8] sm:%s23]
            %35 = vst [vmem:[%s31 + $0x4] sm:%s23] %v34
            %v36 = vld [vmem:[%s30 + $0x10] sm:%s23]
            %37 = vst [vmem:[%s31 + $0x8] sm:%s23] %v36
            %v38 = vld [vmem:[%s30 + $0x18] sm:%s23]
            %39 = vst [vmem:[%s31 + $0xc] sm:%s23] %v38
            %v40 = vld [vmem:[%s30 + $0x20] sm:%s23]
            %41 = vst [vmem:[%s31 + $0x10] sm:%s23] %v40
            %v42 = vld [vmem:[%s30 + $0x28] sm:%s23]
            %43 = vst [vmem:[%s31 + $0x14] sm:%s23] %v42
            %v44 = vld [vmem:[%s30 + $0x30] sm:%s23]
            %45 = vst [vmem:[%s31 + $0x18] sm:%s23] %v44
            %v46 = vld [vmem:[%s30 + $0x38] sm:%s23]
            %47 = vst [vmem:[%s31 + $0x1c] sm:%s23] %v46
            %v48 = vld [vmem:[%s30 + $0x40] sm:%s23]
            %49 = vst [vmem:[%s31 + $0x20] sm:%s23] %v48
            %v50 = vld [vmem:[%s30 + $0x48] sm:%s23]
            %51 = vst [vmem:[%s31 + $0x24] sm:%s23] %v50
            %v52 = vld [vmem:[%s30 + $0x50] sm:%s23]
            %53 = vst [vmem:[%s31 + $0x28] sm:%s23] %v52
            %v54 = vld [vmem:[%s30 + $0x58] sm:%s23]
            %55 = vst [vmem:[%s31 + $0x2c] sm:%s23] %v54
            %v56 = vld [vmem:[%s30 + $0x60] sm:%s23]
            %57 = vst [vmem:[%s31 + $0x30] sm:%s23] %v56
            %v58 = vld [vmem:[%s30 + $0x68] sm:%s23]
            %59 = vst [vmem:[%s31 + $0x34] sm:%s23] %v58
            %v60 = vld [vmem:[%s30 + $0x70] sm:%s23]
            %61 = vst [vmem:[%s31 + $0x38] sm:%s23] %v60
            %v62 = vld [vmem:[%s30 + $0x78] sm:%s23]
            %63 = vst [vmem:[%s31 + $0x3c] sm:%s23] %v62
          $region26: #{residual_block.7} parent=20 // loop_footer
            %s29 = sadd.s32 1, %s25
          $region27: #{residual_block.7} parent=20 // loop_footer_branch
            %24 = sbr.rel target = $region23
          $region28: #{residual_block.7} parent=20 // loop_exit
            _
        $region21: #{residual_block.7} parent=12 // pred_fallthru
          _
      $region13: #{residual_block.7} parent=8 // pred_fallthru
        _
      %116 = vnop
    $region9: #{residual_block.7} parent=1 // pred_fallthru
      _
    // Predicated region
    $region47: #{residual_block.7} parent=1 // pred_check
      _
    $region48: #{residual_block.7} parent=1 // pred_check_branch
      %118 = sbr.rel (0) target = $region50
    $region49: #{residual_block.7} parent=1 // pred_region
      _
    $region50: #{residual_block.7} parent=1 // pred_fallthru
      _
    // Predicated region
    $region51: #{residual_block.7} parent=1 // pred_check
      _
    $region52: #{residual_block.7} parent=1 // pred_check_branch
      %120 = sbr.rel (0) target = $region54
    $region53: #{residual_block.7} parent=1 // pred_region
      _
    $region54: #{residual_block.7} parent=1 // pred_fallthru
      _
    // Predicated region
    $region55: #{residual_block.7} parent=1 // pred_check
      _
    $region56: #{residual_block.7} parent=1 // pred_check_branch
      %122 = sbr.rel (0) target = $region58
    $region57: #{residual_block.7} parent=1 // pred_region
      _
    $region58: #{residual_block.7} parent=1 // pred_fallthru
      _
    // Predicated region
    $region59: #{residual_block.7} parent=1 // pred_check
      _
    $region60: #{residual_block.7} parent=1 // pred_check_branch
      %124 = sbr.rel (0) target = $region62
    $region61: #{residual_block.7} parent=1 // pred_region
      _
    $region62: #{residual_block.7} parent=1 // pred_fallthru
      _
    // Predicated region
    $region63: #{residual_block.7} parent=1 // pred_check
      _
    $region64: #{residual_block.7} parent=1 // pred_check_branch
      %126 = sbr.rel (0) target = $region66
    $region65: #{residual_block.7} parent=1 // pred_region
      _
    $region66: #{residual_block.7} parent=1 // pred_fallthru
      _
    %v127 = vld [vmem:[%s0] sm:$0xf]
    %v128 = vld [vmem:[%s0 + $0x4] sm:$0xf]
    %v129 = vld [vmem:[%s0 + $0x8] sm:$0xf]
    %v130 = vld [vmem:[%s0 + $0xc] sm:$0xf]
    %v131 = vld [vmem:[%s0 + $0x10] sm:$0xf]
    %v132 = vld [vmem:[%s0 + $0x14] sm:$0xf]
    %v133 = vld [vmem:[%s0 + $0x18] sm:$0xf]
    %v134 = vld [vmem:[%s0 + $0x1c] sm:$0xf]
    %v135 = vld [vmem:[%s0 + $0x20] sm:$0xf]
    %v136 = vld [vmem:[%s0 + $0x24] sm:$0xf]
    %v137 = vld [vmem:[%s0 + $0x28] sm:$0xf]
    %v138 = vld [vmem:[%s0 + $0x2c] sm:$0xf]
    %v139 = vld [vmem:[%s0 + $0x30] sm:$0xf]
    %v140 = vld [vmem:[%s0 + $0x34] sm:$0xf]
    %v141 = vld [vmem:[%s0 + $0x38] sm:$0xf]
    %v142 = vld [vmem:[%s0 + $0x3c] sm:$0xf]
    %v143 = vunpack.c.l.bf16 %v127
    %v144 = vunpack.c.l.bf16 %v128
    %v145 = vunpack.c.l.bf16 %v129
    %v146 = vunpack.c.l.bf16 %v130
    %v147 = vunpack.c.l.bf16 %v131
    %v148 = vunpack.c.l.bf16 %v132
    %v149 = vunpack.c.l.bf16 %v133
    %v150 = vunpack.c.l.bf16 %v134
    %v151 = vunpack.c.l.bf16 %v135
    %v152 = vunpack.c.l.bf16 %v136
    %v153 = vunpack.c.l.bf16 %v137
    %v154 = vunpack.c.l.bf16 %v138
    %v155 = vunpack.c.l.bf16 %v139
    %v156 = vunpack.c.l.bf16 %v140
    %v157 = vunpack.c.l.bf16 %v141
    %v158 = vunpack.c.l.bf16 %v142
    %v159 = vld [vmem:[%s2] sm:$0x1]
    %v161 = vlaneseq
    %v162 = vshrl.u32 %v161, 7
    %v163 = vsub.s32 0, %v162
    %v164 = vrot.slane %v159, %v163
    %v166 = vmul.f32 %v143, %v164
    %v167 = vmul.f32 %v144, %v164
    %v168 = vmul.f32 %v145, %v164
    %v169 = vmul.f32 %v146, %v164
    %v170 = vmul.f32 %v147, %v164
    %v171 = vmul.f32 %v148, %v164
    %v172 = vmul.f32 %v149, %v164
    %v173 = vmul.f32 %v150, %v164
    %v174 = vmul.f32 %v151, %v164
    %v175 = vmul.f32 %v152, %v164
    %v176 = vmul.f32 %v153, %v164
    %v177 = vmul.f32 %v154, %v164
    %v178 = vmul.f32 %v155, %v164
    %v179 = vmul.f32 %v156, %v164
    %v180 = vmul.f32 %v157, %v164
    %v181 = vmul.f32 %v158, %v164
    %v182 = vld [vmem:[%s3] sm:$0x1]
    %v184 = vlaneseq
    %v185 = vshrl.u32 %v184, 7
    %v186 = vsub.s32 0, %v185
    %v187 = vrot.slane %v182, %v186
    %v189 = vadd.f32 %v166, %v187
    %v190 = vadd.f32 %v167, %v187
    %v191 = vadd.f32 %v168, %v187
    %v192 = vadd.f32 %v169, %v187
    %v193 = vadd.f32 %v170, %v187
    %v194 = vadd.f32 %v171, %v187
    %v195 = vadd.f32 %v172, %v187
    %v196 = vadd.f32 %v173, %v187
    %v197 = vadd.f32 %v174, %v187
    %v198 = vadd.f32 %v175, %v187
    %v199 = vadd.f32 %v176, %v187
    %v200 = vadd.f32 %v177, %v187
    %v201 = vadd.f32 %v178, %v187
    %v202 = vadd.f32 %v179, %v187
    %v203 = vadd.f32 %v180, %v187
    %v204 = vadd.f32 %v181, %v187
    %v205 = vld [vmem:[#allocation2] sm:$0xf]
    %v206 = vld [vmem:[#allocation2 + $0x4] sm:$0xf]
    %v207 = vld [vmem:[#allocation2 + $0x8] sm:$0xf]
    %v208 = vld [vmem:[#allocation2 + $0xc] sm:$0xf]
    %v209 = vld [vmem:[#allocation2 + $0x10] sm:$0xf]
    %v210 = vld [vmem:[#allocation2 + $0x14] sm:$0xf]
    %v211 = vld [vmem:[#allocation2 + $0x18] sm:$0xf]
    %v212 = vld [vmem:[#allocation2 + $0x1c] sm:$0xf]
    %v213 = vld [vmem:[#allocation2 + $0x20] sm:$0xf]
    %v214 = vld [vmem:[#allocation2 + $0x24] sm:$0xf]
    %v215 = vld [vmem:[#allocation2 + $0x28] sm:$0xf]
    %v216 = vld [vmem:[#allocation2 + $0x2c] sm:$0xf]
    %v217 = vld [vmem:[#allocation2 + $0x30] sm:$0xf]
    %v218 = vld [vmem:[#allocation2 + $0x34] sm:$0xf]
    %v219 = vld [vmem:[#allocation2 + $0x38] sm:$0xf]
    %v220 = vld [vmem:[#allocation2 + $0x3c] sm:$0xf]
    %v221 = vunpack.c.l.bf16 %v205
    %v222 = vunpack.c.l.bf16 %v206
    %v223 = vunpack.c.l.bf16 %v207
    %v224 = vunpack.c.l.bf16 %v208
    %v225 = vunpack.c.l.bf16 %v209
    %v226 = vunpack.c.l.bf16 %v210
    %v227 = vunpack.c.l.bf16 %v211
    %v228 = vunpack.c.l.bf16 %v212
    %v229 = vunpack.c.l.bf16 %v213
    %v230 = vunpack.c.l.bf16 %v214
    %v231 = vunpack.c.l.bf16 %v215
    %v232 = vunpack.c.l.bf16 %v216
    %v233 = vunpack.c.l.bf16 %v217
    %v234 = vunpack.c.l.bf16 %v218
    %v235 = vunpack.c.l.bf16 %v219
    %v236 = vunpack.c.l.bf16 %v220
    %v237 = vld [vmem:[%s4] sm:$0x1]
    %v239 = vlaneseq
    %v240 = vshrl.u32 %v239, 7
    %v241 = vsub.s32 0, %v240
    %v242 = vrot.slane %v237, %v241
    %v244 = vmul.f32 %v221, %v242
    %v245 = vmul.f32 %v222, %v242
    %v246 = vmul.f32 %v223, %v242
    %v247 = vmul.f32 %v224, %v242
    %v248 = vmul.f32 %v225, %v242
    %v249 = vmul.f32 %v226, %v242
    %v250 = vmul.f32 %v227, %v242
    %v251 = vmul.f32 %v228, %v242
    %v252 = vmul.f32 %v229, %v242
    %v253 = vmul.f32 %v230, %v242
    %v254 = vmul.f32 %v231, %v242
    %v255 = vmul.f32 %v232, %v242
    %v256 = vmul.f32 %v233, %v242
    %v257 = vmul.f32 %v234, %v242
    %v258 = vmul.f32 %v235, %v242
    %v259 = vmul.f32 %v236, %v242
    %v260 = vld [vmem:[%s5] sm:$0x1]
    %v262 = vlaneseq
    %v263 = vshrl.u32 %v262, 7
    %v264 = vsub.s32 0, %v263
    %v265 = vrot.slane %v260, %v264
    %v267 = vadd.f32 %v244, %v265
    %v268 = vadd.f32 %v245, %v265
    %v269 = vadd.f32 %v246, %v265
    %v270 = vadd.f32 %v247, %v265
    %v271 = vadd.f32 %v248, %v265
    %v272 = vadd.f32 %v249, %v265
    %v273 = vadd.f32 %v250, %v265
    %v274 = vadd.f32 %v251, %v265
    %v275 = vadd.f32 %v252, %v265
    %v276 = vadd.f32 %v253, %v265
    %v277 = vadd.f32 %v254, %v265
    %v278 = vadd.f32 %v255, %v265
    %v279 = vadd.f32 %v256, %v265
    %v280 = vadd.f32 %v257, %v265
    %v281 = vadd.f32 %v258, %v265
    %v282 = vadd.f32 %v259, %v265
    %v283 = vadd.f32 %v189, %v267
    %v284 = vadd.f32 %v190, %v268
    %v285 = vadd.f32 %v191, %v269
    %v286 = vadd.f32 %v192, %v270
    %v287 = vadd.f32 %v193, %v271
    %v288 = vadd.f32 %v194, %v272
    %v289 = vadd.f32 %v195, %v273
    %v290 = vadd.f32 %v196, %v274
    %v291 = vadd.f32 %v197, %v275
    %v292 = vadd.f32 %v198, %v276
    %v293 = vadd.f32 %v199, %v277
    %v294 = vadd.f32 %v200, %v278
    %v295 = vadd.f32 %v201, %v279
    %v296 = vadd.f32 %v202, %v280
    %v297 = vadd.f32 %v203, %v281
    %v298 = vadd.f32 %v204, %v282
    %v299 = vmax.f32 %v283, 0.0
    %v300 = vmax.f32 %v284, 0.0
    %v301 = vmax.f32 %v285, 0.0
    %v302 = vmax.f32 %v286, 0.0
    %v303 = vmax.f32 %v287, 0.0
    %v304 = vmax.f32 %v288, 0.0
    %v305 = vmax.f32 %v289, 0.0
    %v306 = vmax.f32 %v290, 0.0
    %v307 = vmax.f32 %v291, 0.0
    %v308 = vmax.f32 %v292, 0.0
    %v309 = vmax.f32 %v293, 0.0
    %v310 = vmax.f32 %v294, 0.0
    %v311 = vmax.f32 %v295, 0.0
    %v312 = vmax.f32 %v296, 0.0
    %v313 = vmax.f32 %v297, 0.0
    %v314 = vmax.f32 %v298, 0.0
    %315 = vst [vmem:[%s6] sm:$0xff] %v299
    %316 = vst [vmem:[%s6 + $0x8] sm:$0xff] %v300
    %317 = vst [vmem:[%s6 + $0x10] sm:$0xff] %v301
    %318 = vst [vmem:[%s6 + $0x18] sm:$0xff] %v302
    %319 = vst [vmem:[%s6 + $0x20] sm:$0xff] %v303
    %320 = vst [vmem:[%s6 + $0x28] sm:$0xff] %v304
    %321 = vst [vmem:[%s6 + $0x30] sm:$0xff] %v305
    %322 = vst [vmem:[%s6 + $0x38] sm:$0xff] %v306
    %323 = vst [vmem:[%s6 + $0x40] sm:$0xff] %v307
    %324 = vst [vmem:[%s6 + $0x48] sm:$0xff] %v308
    %325 = vst [vmem:[%s6 + $0x50] sm:$0xff] %v309
    %326 = vst [vmem:[%s6 + $0x58] sm:$0xff] %v310
    %327 = vst [vmem:[%s6 + $0x60] sm:$0xff] %v311
    %328 = vst [vmem:[%s6 + $0x68] sm:$0xff] %v312
    %329 = vst [vmem:[%s6 + $0x70] sm:$0xff] %v313
    %330 = vst [vmem:[%s6 + $0x78] sm:$0xff] %v314
    // Predicated region
    $region67: #{residual_block.7} parent=1 // pred_check
      _
    $region68: #{residual_block.7} parent=1 // pred_check_branch
      %332 = sbr.rel (0) target = $region70
    $region69: #{residual_block.7} parent=1 // pred_region
      _
    $region70: #{residual_block.7} parent=1 // pred_fallthru
      _
    // Predicated region
    $region71: #{residual_block.7} parent=1 // pred_check
      _
    $region72: #{residual_block.7} parent=1 // pred_check_branch
      %334 = sbr.rel (0) target = $region74
    $region73: #{residual_block.7} parent=1 // pred_region
      _
    $region74: #{residual_block.7} parent=1 // pred_fallthru
      _

</llo_original>
